<compile_context>
chip_gen: v7x
topology: tpu7x:2x2x1
jax: 0.10.0
libtpu: 0.0.40
codegen_flags: <defaults>
</compile_context>

<pallas_src>
import functools

import jax
import jax.numpy as jnp
from jax.experimental import pallas as pl
from jax.experimental.pallas import tpu as pltpu

BLOCK_LIST = ['blocks2', 'blocks3', 'blocks4', 'blocks5', 'blocks6']

NET_CONFIG = {
    'blocks2': [[3, 16, 32, 1, False]],
    'blocks3': [[3, 32, 64, 2, False], [3, 64, 64, 1, False]],
    'blocks4': [[3, 64, 128, 2, False], [3, 128, 128, 1, False]],
    'blocks5': [[3, 128, 256, 2, False], [5, 256, 256, 1, False],
                [5, 256, 256, 1, False], [5, 256, 256, 1, False],
                [5, 256, 256, 1, False], [5, 256, 256, 1, False]],
    'blocks6': [[5, 256, 512, 2, True], [5, 512, 512, 1, True]],
}

# MXU operand dtype for the 1x1 (pointwise) conv: bf16 operands + f32
# accumulation is full-rate on v6e/v7x MXU and halves activation/weight bytes.
# The pure-JAX reference uses the same operand precision so the check is tight.
PW_MATMUL_DTYPE = jnp.bfloat16


def autopad(k, p=None):
    if p is None:
        p = k // 2 if isinstance(k, int) else [x // 2 for x in k]
    return p


def make_divisible_LC(v, divisor=8, min_value=None):
    if min_value is None:
        min_value = divisor
    new_v = max(min_value, int(v + divisor / 2) // divisor * divisor)
    if new_v < 0.9 * v:
        new_v += divisor
    return new_v


def _hardswish(x):
    return x * jnp.clip(x + 3.0, 0.0, 6.0) * (1.0 / 6.0)


# ------------------------- fused per-layer Pallas kernel ---------------------

def _dwsep_kernel(*refs, k, s, use_se):
    """One DepthwiseSeparable layer for one batch element, fully fused.

    depthwise kxk conv (stride s, halo padded in VMEM) + BN + HardSwish
      -> 1x1 conv (MXU matmul, bf16 operands / f32 acc) + BN + HardSwish
      -> optional SE (pool -> FC -> ReLU -> FC -> HardSigmoid(x)=x*HardSwish(x))
    """
    if use_se:
        (x_ref, wdw_ref, s1_ref, b1_ref, wpw_ref, s2_ref, b2_ref,
         sew1_ref, sew2_ref, o_ref, xpad_ref) = refs
    else:
        (x_ref, wdw_ref, s1_ref, b1_ref, wpw_ref, s2_ref, b2_ref,
         o_ref, xpad_ref) = refs
        sew1_ref = sew2_ref = None

    pad = k // 2
    _, H, W, Cin = x_ref.shape
    _, Ho, Wo, Cout = o_ref.shape

    # Halo handled in VMEM (no jnp.pad HBM round-trip): zero the scratch and
    # copy the unpadded input block into its interior.
    xpad_ref[...] = jnp.zeros(xpad_ref.shape, xpad_ref.dtype)
    xpad_ref[pl.ds(pad, H), pl.ds(pad, W), :] = x_ref[0]

    # Depthwise conv, computed directly at stride s (no compute-then-subsample).
    w = wdw_ref[...]                                  # (k, k, Cin), loaded once
    acc = jnp.zeros((Ho, Wo, Cin), jnp.float32)
    for i in range(k):                                # static unroll: k*k taps
        for j in range(k):
            if s == 1:
                patch = xpad_ref[pl.ds(i, Ho), pl.ds(j, Wo), :]
            else:
                patch = xpad_ref[pl.ds(i, Ho, stride=s),
                                 pl.ds(j, Wo, stride=s), :]
            acc = acc + patch.astype(jnp.float32) * w[i:i + 1, j:j + 1, :]
    # TODO(synk): on v5e (2 vld slots/bundle), reuse loaded row bands via
    # pltpu.roll instead of k*k separate loads.
    y = _hardswish(acc * s1_ref[...] + b1_ref[...])   # (Ho, Wo, Cin), f32

    # Pointwise 1x1 conv as a single MXU matmul over the flattened pixels.
    y2 = y.reshape(Ho * Wo, Cin).astype(PW_MATMUL_DTYPE)
    z = jnp.dot(y2, wpw_ref[...].astype(PW_MATMUL_DTYPE),
                preferred_element_type=jnp.float32)   # (Ho*Wo, Cout), f32
    z = _hardswish(z * s2_ref[...] + b2_ref[...])

    # Squeeze-excite, fused (no extra HBM round-trip of the activation).
    if use_se:
        pooled = jnp.sum(z, axis=0, keepdims=True) * (1.0 / float(Ho * Wo))
        h = jnp.maximum(
            jnp.dot(pooled, sew1_ref[...], preferred_element_type=jnp.float32),
            0.0)
        g = jnp.dot(h, sew2_ref[...], preferred_element_type=jnp.float32)
        gate = g * _hardswish(g)          # HardSigmoid(x) := x * HardSwish(x)
        z = z * gate                      # (Ho*Wo, Cout) * (1, Cout)

    o_ref[0] = z.reshape(Ho, Wo, Cout).astype(o_ref.dtype)


def depthwise_separable_forward(x, p):
    """x: NHWC. One fused pallas_call per layer, grid over the batch dim."""
    N, H, W, Cin = x.shape
    k, s, use_se = p['k'], p['s'], p['use_se']
    pad = autopad(k)
    Ho = (H + 2 * pad - k) // s + 1
    Wo = (W + 2 * pad - k) // s + 1
    Hp, Wp = H + 2 * pad, W + 2 * pad
    Cout = p['wpw'].shape[1]

    args = [x, p['wdw'], p['s1'], p['b1'], p['wpw'], p['s2'], p['b2']]
    in_specs = [
        pl.BlockSpec((1, H, W, Cin), lambda b: (b, 0, 0, 0)),
        pl.BlockSpec((k, k, Cin), lambda b: (0, 0, 0)),
        pl.BlockSpec((1, Cin), lambda b: (0, 0)),
        pl.BlockSpec((1, Cin), lambda b: (0, 0)),
        pl.BlockSpec((Cin, Cout), lambda b: (0, 0)),
        pl.BlockSpec((1, Cout), lambda b: (0, 0)),
        pl.BlockSpec((1, Cout), lambda b: (0, 0)),
    ]
    if use_se:
        Cr = p['se_w1'].shape[1]
        args += [p['se_w1'], p['se_w2']]
        in_specs += [pl.BlockSpec((Cout, Cr), lambda b: (0, 0)),
                     pl.BlockSpec((Cr, Cout), lambda b: (0, 0))]

    # TODO(synk): for large spatial resolutions (early blocks at full image
    # size) add an H grid axis with a (k-1)-row halo so the per-step VMEM
    # footprint stays within v7x's 64 MiB; PP-LCNet blocks5/6 resolutions fit
    # comfortably with a whole image per grid step.
    return pl.pallas_call(
        functools.partial(_dwsep_kernel, k=k, s=s, use_se=use_se),
        out_shape=jax.ShapeDtypeStruct((N, Ho, Wo, Cout), x.dtype),
        grid=(N,),
        in_specs=in_specs,
        out_specs=pl.BlockSpec((1, Ho, Wo, Cout), lambda b: (b, 0, 0, 0)),
        scratch_shapes=[pltpu.VMEM((Hp, Wp, Cin), x.dtype)],
        compiler_params=pltpu.CompilerParams(dimension_semantics=("parallel",)),
    )(*args)


def pplc_block_forward(x_nchw, params):
    x = jnp.transpose(x_nchw, (0, 2, 3, 1))   # NCHW -> NHWC (once, at entry)
    for p in params:
        x = depthwise_separable_forward(x, p)
    return jnp.transpose(x, (0, 3, 1, 2))     # NHWC -> NCHW (once, at exit)


# ----------------------------- parameter init -------------------------------

def _fold_bn(gamma, beta, mean, var, eps=1e-5):
    scale = gamma / jnp.sqrt(var + eps)
    bias = beta - mean * scale
    return scale.reshape(1, -1), bias.reshape(1, -1)


def init_pplc_block_params(key, scale, block_num, reduction=16):
    cfg = NET_CONFIG[BLOCK_LIST[block_num]]
    params = []
    for (k, in_c, out_c, s, use_se) in cfg:
        inp = make_divisible_LC(in_c * scale)
        oup = make_divisible_LC(out_c * scale)
        keys = jax.random.split(key, 13)
        key = keys[-1]
        wdw = 0.2 * jax.random.normal(keys[0], (k, k, inp), jnp.float32)
        g1 = 1.0 + 0.1 * jax.random.normal(keys[1], (inp,), jnp.float32)
        bt1 = 0.05 * jax.random.normal(keys[2], (inp,), jnp.float32)
        m1 = 0.05 * jax.random.normal(keys[3], (inp,), jnp.float32)
        v1 = 1.0 + 0.1 * jnp.abs(jax.random.normal(keys[4], (inp,), jnp.float32))
        s1, b1 = _fold_bn(g1, bt1, m1, v1)
        wpw = (1.0 / float(inp) ** 0.5) * jax.random.normal(
            keys[5], (inp, oup), jnp.float32)
        g2 = 1.0 + 0.1 * jax.random.normal(keys[6], (oup,), jnp.float32)
        bt2 = 0.05 * jax.random.normal(keys[7], (oup,), jnp.float32)
        m2 = 0.05 * jax.random.normal(keys[8], (oup,), jnp.float32)
        v2 = 1.0 + 0.1 * jnp.abs(jax.random.normal(keys[9], (oup,), jnp.float32))
        s2, b2 = _fold_bn(g2, bt2, m2, v2)
        p = dict(k=k, s=s, use_se=use_se, wdw=wdw, s1=s1, b1=b1,
                 wpw=wpw, s2=s2, b2=b2)
        if use_se:
            cr = oup // reduction
            p['se_w1'] = 0.2 * jax.random.normal(keys[10], (oup, cr), jnp.float32)
            p['se_w2'] = 0.2 * jax.random.normal(keys[11], (cr, oup), jnp.float32)
        params.append(p)
    return params


# --------------------------- pure-JAX reference ------------------------------

def pplc_block_reference(x_nchw, params):
    x = jnp.transpose(x_nchw, (0, 2, 3, 1))
    for p in params:
        k, s, use_se = p['k'], p['s'], p['use_se']
        C = x.shape[-1]
        pad = autopad(k)
        rhs = p['wdw'].reshape(k, k, 1, C)
        y = jax.lax.conv_general_dilated(
            x, rhs, window_strides=(s, s), padding=[(pad, pad), (pad, pad)],
            dimension_numbers=('NHWC', 'HWIO', 'NHWC'), feature_group_count=C)
        y = _hardswish(y * p['s1'].reshape(1, 1, 1, C) + p['b1'].reshape(1, 1, 1, C))
        Cout = p['wpw'].shape[1]
        # Same operand precision as the kernel's pointwise matmul.
        z = jnp.einsum('nhwc,co->nhwo',
                       y.astype(PW_MATMUL_DTYPE),
                       p['wpw'].astype(PW_MATMUL_DTYPE),
                       preferred_element_type=jnp.float32)
        z = _hardswish(z * p['s2'].reshape(1, 1, 1, Cout)
                       + p['b2'].reshape(1, 1, 1, Cout))
        if use_se:
            g = jnp.mean(z, axis=(1, 2))                      # (N, Cout)
            h = jnp.maximum(g @ p['se_w1'], 0.0)
            gg = h @ p['se_w2']
            gate = gg * _hardswish(gg)
            z = z * gate[:, None, None, :]
        x = z
    return jnp.transpose(x, (0, 3, 1, 2))


# ----------------------------------- main ------------------------------------

if __name__ == "__main__":
    key = jax.random.PRNGKey(0)
    kx, kp = jax.random.split(key)

    # PPLC_Block(scale=0.25, block_num=4) -> 'blocks6':
    #   DepthwiseSeparable(64->128, k=5, s=2, SE)
    #   DepthwiseSeparable(128->128, k=5, s=1, SE)
    scale_, block_num = 0.25, 4
    params = init_pplc_block_params(kp, scale_, block_num)
    cin = params[0]['wdw'].shape[-1]  # 64

    x = jax.random.normal(kx, (2, cin, 16, 16), jnp.float32)  # NCHW, as PyTorch
    out = jax.block_until_ready(pplc_block_forward(x, params))
    ref = jax.block_until_ready(pplc_block_reference(x, params))

    assert out.shape == ref.shape, (out.shape, ref.shape)
    max_err = float(jnp.max(jnp.abs(out - ref)))
    # bf16 matmul operands (in both kernel and reference) -> allow small slack
    # for accumulation-order / rounding-boundary differences.
    if not bool(jnp.isfinite(out).all()) or max_err > 1e-2:
        raise SystemExit(f"mismatch: max_err={max_err}")
    print("KERNEL_OK")
</pallas_src>

<mosaic_0001>
module attributes {stable_mosaic.version = 11 : i64} {
  func.func @_dwsep_kernel(%arg0: i32, %arg1: memref<1x16x16x64xf32, #tpu.memory_space<vmem>>, %arg2: memref<5x5x64xf32, #tpu.memory_space<vmem>>, %arg3: memref<1x64xf32, #tpu.memory_space<vmem>>, %arg4: memref<1x64xf32, #tpu.memory_space<vmem>>, %arg5: memref<64x128xf32, #tpu.memory_space<vmem>>, %arg6: memref<1x128xf32, #tpu.memory_space<vmem>>, %arg7: memref<1x128xf32, #tpu.memory_space<vmem>>, %arg8: memref<128x8xf32, #tpu.memory_space<vmem>>, %arg9: memref<8x128xf32, #tpu.memory_space<vmem>>, %arg10: memref<1x8x8x128xf32, #tpu.memory_space<vmem>>, %arg11: memref<20x20x64xf32, #tpu.memory_space<vmem>>) attributes {dimension_semantics = [#tpu.dimension_semantics<parallel>], iteration_bounds = array<i64: 2>, scalar_prefetch = 0 : i64, scratch_operands = 1 : i64, tpu.core_type = #tpu.core_type<tc>, window_params = [{transform_indices = @transform_0, window_bounds = array<i64: 1, 16, 16, 64>}, {pipeline_mode = #tpu.pipeline_mode<synchronous>, transform_indices = @transform_1, window_bounds = array<i64: 5, 5, 64>}, {pipeline_mode = #tpu.pipeline_mode<synchronous>, transform_indices = @transform_2, window_bounds = array<i64: 1, 64>}, {pipeline_mode = #tpu.pipeline_mode<synchronous>, transform_indices = @transform_3, window_bounds = array<i64: 1, 64>}, {pipeline_mode = #tpu.pipeline_mode<synchronous>, transform_indices = @transform_4, window_bounds = array<i64: 64, 128>}, {pipeline_mode = #tpu.pipeline_mode<synchronous>, transform_indices = @transform_5, window_bounds = array<i64: 1, 128>}, {pipeline_mode = #tpu.pipeline_mode<synchronous>, transform_indices = @transform_6, window_bounds = array<i64: 1, 128>}, {pipeline_mode = #tpu.pipeline_mode<synchronous>, transform_indices = @transform_7, window_bounds = array<i64: 128, 8>}, {pipeline_mode = #tpu.pipeline_mode<synchronous>, transform_indices = @transform_8, window_bounds = array<i64: 8, 128>}, {transform_indices = @transform_9, window_bounds = array<i64: 1, 8, 8, 128>}]} {
    %cst = arith.constant 0.000000e+00 : f32
    %0 = vector.broadcast %cst : f32 to vector<20x20x64xf32>
    %c0 = arith.constant 0 : index
    %c0_0 = arith.constant 0 : index
    %c0_1 = arith.constant 0 : index
    %1 = vector.load %arg11[%c0, %c0_0, %c0_1] : memref<20x20x64xf32, #tpu.memory_space<vmem>>, vector<20x20x64xf32>
    tpu.vector_store %arg11[%c0, %c0_0, %c0_1], %0 {strides = array<i32>} : memref<20x20x64xf32, #tpu.memory_space<vmem>>, vector<20x20x64xf32>,
    %c0_2 = arith.constant 0 : index
    %c0_3 = arith.constant 0 : index
    %c0_4 = arith.constant 0 : index
    %c0_5 = arith.constant 0 : index
    %2 = vector.load %arg1[%c0_2, %c0_3, %c0_4, %c0_5] : memref<1x16x16x64xf32, #tpu.memory_space<vmem>>, vector<1x16x16x64xf32>
    %3 = vector.shape_cast %2 : vector<1x16x16x64xf32> to vector<16x16x64xf32>
    %c2 = arith.constant 2 : index
    %c2_6 = arith.constant 2 : index
    %c0_7 = arith.constant 0 : index
    %4 = vector.load %arg11[%c2, %c2_6, %c0_7] : memref<20x20x64xf32, #tpu.memory_space<vmem>>, vector<16x16x64xf32>
    tpu.vector_store %arg11[%c2, %c2_6, %c0_7], %3 {strides = array<i32>} : memref<20x20x64xf32, #tpu.memory_space<vmem>>, vector<16x16x64xf32>,
    %c0_8 = arith.constant 0 : index
    %c0_9 = arith.constant 0 : index
    %c0_10 = arith.constant 0 : index
    %5 = vector.load %arg2[%c0_8, %c0_9, %c0_10] : memref<5x5x64xf32, #tpu.memory_space<vmem>>, vector<5x5x64xf32>
    %cst_11 = arith.constant 0.000000e+00 : f32
    %6 = vector.broadcast %cst_11 : f32 to vector<8x8x64xf32>
    %c0_12 = arith.constant 0 : index
    %c0_13 = arith.constant 0 : index
    %c0_14 = arith.constant 0 : index
    %7 = tpu.strided_load %arg11[%c0_12, %c0_13, %c0_14] {strides = array<i32: 2, 2, 1>} : memref<20x20x64xf32, #tpu.memory_space<vmem>>, vector<8x8x64xf32>
    %8 = vector.extract_strided_slice %5 {offsets = [0, 0, 0], sizes = [1, 1, 64], strides = [1, 1, 1]} : vector<5x5x64xf32> to vector<1x1x64xf32>
    %9 = vector.broadcast %8 : vector<1x1x64xf32> to vector<8x8x64xf32>
    %10 = arith.mulf %7, %9 : vector<8x8x64xf32>
    %11 = arith.addf %6, %10 : vector<8x8x64xf32>
    %c0_15 = arith.constant 0 : index
    %c1 = arith.constant 1 : index
    %c0_16 = arith.constant 0 : index
    %12 = tpu.strided_load %arg11[%c0_15, %c1, %c0_16] {strides = array<i32: 2, 2, 1>} : memref<20x20x64xf32, #tpu.memory_space<vmem>>, vector<8x8x64xf32>
    %13 = vector.extract_strided_slice %5 {offsets = [0, 1, 0], sizes = [1, 1, 64], strides = [1, 1, 1]} : vector<5x5x64xf32> to vector<1x1x64xf32>
    %14 = vector.broadcast %13 : vector<1x1x64xf32> to vector<8x8x64xf32>
    %15 = arith.mulf %12, %14 : vector<8x8x64xf32>
    %16 = arith.addf %11, %15 : vector<8x8x64xf32>
    %c0_17 = arith.constant 0 : index
    %c2_18 = arith.constant 2 : index
    %c0_19 = arith.constant 0 : index
    %17 = tpu.strided_load %arg11[%c0_17, %c2_18, %c0_19] {strides = array<i32: 2, 2, 1>} : memref<20x20x64xf32, #tpu.memory_space<vmem>>, vector<8x8x64xf32>
    %18 = vector.extract_strided_slice %5 {offsets = [0, 2, 0], sizes = [1, 1, 64], strides = [1, 1, 1]} : vector<5x5x64xf32> to vector<1x1x64xf32>
    %19 = vector.broadcast %18 : vector<1x1x64xf32> to vector<8x8x64xf32>
    %20 = arith.mulf %17, %19 : vector<8x8x64xf32>
    %21 = arith.addf %16, %20 : vector<8x8x64xf32>
    %c0_20 = arith.constant 0 : index
    %c3 = arith.constant 3 : index
    %c0_21 = arith.constant 0 : index
    %22 = tpu.strided_load %arg11[%c0_20, %c3, %c0_21] {strides = array<i32: 2, 2, 1>} : memref<20x20x64xf32, #tpu.memory_space<vmem>>, vector<8x8x64xf32>
    %23 = vector.extract_strided_slice %5 {offsets = [0, 3, 0], sizes = [1, 1, 64], strides = [1, 1, 1]} : vector<5x5x64xf32> to vector<1x1x64xf32>
    %24 = vector.broadcast %23 : vector<1x1x64xf32> to vector<8x8x64xf32>
    %25 = arith.mulf %22, %24 : vector<8x8x64xf32>
    %26 = arith.addf %21, %25 : vector<8x8x64xf32>
    %c0_22 = arith.constant 0 : index
    %c4 = arith.constant 4 : index
    %c0_23 = arith.constant 0 : index
    %27 = tpu.strided_load %arg11[%c0_22, %c4, %c0_23] {strides = array<i32: 2, 2, 1>} : memref<20x20x64xf32, #tpu.memory_space<vmem>>, vector<8x8x64xf32>
    %28 = vector.extract_strided_slice %5 {offsets = [0, 4, 0], sizes = [1, 1, 64], strides = [1, 1, 1]} : vector<5x5x64xf32> to vector<1x1x64xf32>
    %29 = vector.broadcast %28 : vector<1x1x64xf32> to vector<8x8x64xf32>
    %30 = arith.mulf %27, %29 : vector<8x8x64xf32>
    %31 = arith.addf %26, %30 : vector<8x8x64xf32>
    %c1_24 = arith.constant 1 : index
    %c0_25 = arith.constant 0 : index
    %c0_26 = arith.constant 0 : index
    %32 = tpu.strided_load %arg11[%c1_24, %c0_25, %c0_26] {strides = array<i32: 2, 2, 1>} : memref<20x20x64xf32, #tpu.memory_space<vmem>>, vector<8x8x64xf32>
    %33 = vector.extract_strided_slice %5 {offsets = [1, 0, 0], sizes = [1, 1, 64], strides = [1, 1, 1]} : vector<5x5x64xf32> to vector<1x1x64xf32>
    %34 = vector.broadcast %33 : vector<1x1x64xf32> to vector<8x8x64xf32>
    %35 = arith.mulf %32, %34 : vector<8x8x64xf32>
    %36 = arith.addf %31, %35 : vector<8x8x64xf32>
    %c1_27 = arith.constant 1 : index
    %c1_28 = arith.constant 1 : index
    %c0_29 = arith.constant 0 : index
    %37 = tpu.strided_load %arg11[%c1_27, %c1_28, %c0_29] {strides = array<i32: 2, 2, 1>} : memref<20x20x64xf32, #tpu.memory_space<vmem>>, vector<8x8x64xf32>
    %38 = vector.extract_strided_slice %5 {offsets = [1, 1, 0], sizes = [1, 1, 64], strides = [1, 1, 1]} : vector<5x5x64xf32> to vector<1x1x64xf32>
    %39 = vector.broadcast %38 : vector<1x1x64xf32> to vector<8x8x64xf32>
    %40 = arith.mulf %37, %39 : vector<8x8x64xf32>
    %41 = arith.addf %36, %40 : vector<8x8x64xf32>
    %c1_30 = arith.constant 1 : index
    %c2_31 = arith.constant 2 : index
    %c0_32 = arith.constant 0 : index
    %42 = tpu.strided_load %arg11[%c1_30, %c2_31, %c0_32] {strides = array<i32: 2, 2, 1>} : memref<20x20x64xf32, #tpu.memory_space<vmem>>, vector<8x8x64xf32>
    %43 = vector.extract_strided_slice %5 {offsets = [1, 2, 0], sizes = [1, 1, 64], strides = [1, 1, 1]} : vector<5x5x64xf32> to vector<1x1x64xf32>
    %44 = vector.broadcast %43 : vector<1x1x64xf32> to vector<8x8x64xf32>
    %45 = arith.mulf %42, %44 : vector<8x8x64xf32>
    %46 = arith.addf %41, %45 : vector<8x8x64xf32>
    %c1_33 = arith.constant 1 : index
    %c3_34 = arith.constant 3 : index
    %c0_35 = arith.constant 0 : index
    %47 = tpu.strided_load %arg11[%c1_33, %c3_34, %c0_35] {strides = array<i32: 2, 2, 1>} : memref<20x20x64xf32, #tpu.memory_space<vmem>>, vector<8x8x64xf32>
    %48 = vector.extract_strided_slice %5 {offsets = [1, 3, 0], sizes = [1, 1, 64], strides = [1, 1, 1]} : vector<5x5x64xf32> to vector<1x1x64xf32>
    %49 = vector.broadcast %48 : vector<1x1x64xf32> to vector<8x8x64xf32>
    %50 = arith.mulf %47, %49 : vector<8x8x64xf32>
    %51 = arith.addf %46, %50 : vector<8x8x64xf32>
    %c1_36 = arith.constant 1 : index
    %c4_37 = arith.constant 4 : index
    %c0_38 = arith.constant 0 : index
    %52 = tpu.strided_load %arg11[%c1_36, %c4_37, %c0_38] {strides = array<i32: 2, 2, 1>} : memref<20x20x64xf32, #tpu.memory_space<vmem>>, vector<8x8x64xf32>
    %53 = vector.extract_strided_slice %5 {offsets = [1, 4, 0], sizes = [1, 1, 64], strides = [1, 1, 1]} : vector<5x5x64xf32> to vector<1x1x64xf32>
    %54 = vector.broadcast %53 : vector<1x1x64xf32> to vector<8x8x64xf32>
    %55 = arith.mulf %52, %54 : vector<8x8x64xf32>
    %56 = arith.addf %51, %55 : vector<8x8x64xf32>
    %c2_39 = arith.constant 2 : index
    %c0_40 = arith.constant 0 : index
    %c0_41 = arith.constant 0 : index
    %57 = tpu.strided_load %arg11[%c2_39, %c0_40, %c0_41] {strides = array<i32: 2, 2, 1>} : memref<20x20x64xf32, #tpu.memory_space<vmem>>, vector<8x8x64xf32>
    %58 = vector.extract_strided_slice %5 {offsets = [2, 0, 0], sizes = [1, 1, 64], strides = [1, 1, 1]} : vector<5x5x64xf32> to vector<1x1x64xf32>
    %59 = vector.broadcast %58 : vector<1x1x64xf32> to vector<8x8x64xf32>
    %60 = arith.mulf %57, %59 : vector<8x8x64xf32>
    %61 = arith.addf %56, %60 : vector<8x8x64xf32>
    %c2_42 = arith.constant 2 : index
    %c1_43 = arith.constant 1 : index
    %c0_44 = arith.constant 0 : index
    %62 = tpu.strided_load %arg11[%c2_42, %c1_43, %c0_44] {strides = array<i32: 2, 2, 1>} : memref<20x20x64xf32, #tpu.memory_space<vmem>>, vector<8x8x64xf32>
    %63 = vector.extract_strided_slice %5 {offsets = [2, 1, 0], sizes = [1, 1, 64], strides = [1, 1, 1]} : vector<5x5x64xf32> to vector<1x1x64xf32>
    %64 = vector.broadcast %63 : vector<1x1x64xf32> to vector<8x8x64xf32>
    %65 = arith.mulf %62, %64 : vector<8x8x64xf32>
    %66 = arith.addf %61, %65 : vector<8x8x64xf32>
    %c2_45 = arith.constant 2 : index
    %c2_46 = arith.constant 2 : index
    %c0_47 = arith.constant 0 : index
    %67 = tpu.strided_load %arg11[%c2_45, %c2_46, %c0_47] {strides = array<i32: 2, 2, 1>} : memref<20x20x64xf32, #tpu.memory_space<vmem>>, vector<8x8x64xf32>
    %68 = vector.extract_strided_slice %5 {offsets = [2, 2, 0], sizes = [1, 1, 64], strides = [1, 1, 1]} : vector<5x5x64xf32> to vector<1x1x64xf32>
    %69 = vector.broadcast %68 : vector<1x1x64xf32> to vector<8x8x64xf32>
    %70 = arith.mulf %67, %69 : vector<8x8x64xf32>
    %71 = arith.addf %66, %70 : vector<8x8x64xf32>
    %c2_48 = arith.constant 2 : index
    %c3_49 = arith.constant 3 : index
    %c0_50 = arith.constant 0 : index
    %72 = tpu.strided_load %arg11[%c2_48, %c3_49, %c0_50] {strides = array<i32: 2, 2, 1>} : memref<20x20x64xf32, #tpu.memory_space<vmem>>, vector<8x8x64xf32>
    %73 = vector.extract_strided_slice %5 {offsets = [2, 3, 0], sizes = [1, 1, 64], strides = [1, 1, 1]} : vector<5x5x64xf32> to vector<1x1x64xf32>
    %74 = vector.broadcast %73 : vector<1x1x64xf32> to vector<8x8x64xf32>
    %75 = arith.mulf %72, %74 : vector<8x8x64xf32>
    %76 = arith.addf %71, %75 : vector<8x8x64xf32>
    %c2_51 = arith.constant 2 : index
    %c4_52 = arith.constant 4 : index
    %c0_53 = arith.constant 0 : index
    %77 = tpu.strided_load %arg11[%c2_51, %c4_52, %c0_53] {strides = array<i32: 2, 2, 1>} : memref<20x20x64xf32, #tpu.memory_space<vmem>>, vector<8x8x64xf32>
    %78 = vector.extract_strided_slice %5 {offsets = [2, 4, 0], sizes = [1, 1, 64], strides = [1, 1, 1]} : vector<5x5x64xf32> to vector<1x1x64xf32>
    %79 = vector.broadcast %78 : vector<1x1x64xf32> to vector<8x8x64xf32>
    %80 = arith.mulf %77, %79 : vector<8x8x64xf32>
    %81 = arith.addf %76, %80 : vector<8x8x64xf32>
    %c3_54 = arith.constant 3 : index
    %c0_55 = arith.constant 0 : index
    %c0_56 = arith.constant 0 : index
    %82 = tpu.strided_load %arg11[%c3_54, %c0_55, %c0_56] {strides = array<i32: 2, 2, 1>} : memref<20x20x64xf32, #tpu.memory_space<vmem>>, vector<8x8x64xf32>
    %83 = vector.extract_strided_slice %5 {offsets = [3, 0, 0], sizes = [1, 1, 64], strides = [1, 1, 1]} : vector<5x5x64xf32> to vector<1x1x64xf32>
    %84 = vector.broadcast %83 : vector<1x1x64xf32> to vector<8x8x64xf32>
    %85 = arith.mulf %82, %84 : vector<8x8x64xf32>
    %86 = arith.addf %81, %85 : vector<8x8x64xf32>
    %c3_57 = arith.constant 3 : index
    %c1_58 = arith.constant 1 : index
    %c0_59 = arith.constant 0 : index
    %87 = tpu.strided_load %arg11[%c3_57, %c1_58, %c0_59] {strides = array<i32: 2, 2, 1>} : memref<20x20x64xf32, #tpu.memory_space<vmem>>, vector<8x8x64xf32>
    %88 = vector.extract_strided_slice %5 {offsets = [3, 1, 0], sizes = [1, 1, 64], strides = [1, 1, 1]} : vector<5x5x64xf32> to vector<1x1x64xf32>
    %89 = vector.broadcast %88 : vector<1x1x64xf32> to vector<8x8x64xf32>
    %90 = arith.mulf %87, %89 : vector<8x8x64xf32>
    %91 = arith.addf %86, %90 : vector<8x8x64xf32>
    %c3_60 = arith.constant 3 : index
    %c2_61 = arith.constant 2 : index
    %c0_62 = arith.constant 0 : index
    %92 = tpu.strided_load %arg11[%c3_60, %c2_61, %c0_62] {strides = array<i32: 2, 2, 1>} : memref<20x20x64xf32, #tpu.memory_space<vmem>>, vector<8x8x64xf32>
    %93 = vector.extract_strided_slice %5 {offsets = [3, 2, 0], sizes = [1, 1, 64], strides = [1, 1, 1]} : vector<5x5x64xf32> to vector<1x1x64xf32>
    %94 = vector.broadcast %93 : vector<1x1x64xf32> to vector<8x8x64xf32>
    %95 = arith.mulf %92, %94 : vector<8x8x64xf32>
    %96 = arith.addf %91, %95 : vector<8x8x64xf32>
    %c3_63 = arith.constant 3 : index
    %c3_64 = arith.constant 3 : index
    %c0_65 = arith.constant 0 : index
    %97 = tpu.strided_load %arg11[%c3_63, %c3_64, %c0_65] {strides = array<i32: 2, 2, 1>} : memref<20x20x64xf32, #tpu.memory_space<vmem>>, vector<8x8x64xf32>
    %98 = vector.extract_strided_slice %5 {offsets = [3, 3, 0], sizes = [1, 1, 64], strides = [1, 1, 1]} : vector<5x5x64xf32> to vector<1x1x64xf32>
    %99 = vector.broadcast %98 : vector<1x1x64xf32> to vector<8x8x64xf32>
    %100 = arith.mulf %97, %99 : vector<8x8x64xf32>
    %101 = arith.addf %96, %100 : vector<8x8x64xf32>
    %c3_66 = arith.constant 3 : index
    %c4_67 = arith.constant 4 : index
    %c0_68 = arith.constant 0 : index
    %102 = tpu.strided_load %arg11[%c3_66, %c4_67, %c0_68] {strides = array<i32: 2, 2, 1>} : memref<20x20x64xf32, #tpu.memory_space<vmem>>, vector<8x8x64xf32>
    %103 = vector.extract_strided_slice %5 {offsets = [3, 4, 0], sizes = [1, 1, 64], strides = [1, 1, 1]} : vector<5x5x64xf32> to vector<1x1x64xf32>
    %104 = vector.broadcast %103 : vector<1x1x64xf32> to vector<8x8x64xf32>
    %105 = arith.mulf %102, %104 : vector<8x8x64xf32>
    %106 = arith.addf %101, %105 : vector<8x8x64xf32>
    %c4_69 = arith.constant 4 : index
    %c0_70 = arith.constant 0 : index
    %c0_71 = arith.constant 0 : index
    %107 = tpu.strided_load %arg11[%c4_69, %c0_70, %c0_71] {strides = array<i32: 2, 2, 1>} : memref<20x20x64xf32, #tpu.memory_space<vmem>>, vector<8x8x64xf32>
    %108 = vector.extract_strided_slice %5 {offsets = [4, 0, 0], sizes = [1, 1, 64], strides = [1, 1, 1]} : vector<5x5x64xf32> to vector<1x1x64xf32>
    %109 = vector.broadcast %108 : vector<1x1x64xf32> to vector<8x8x64xf32>
    %110 = arith.mulf %107, %109 : vector<8x8x64xf32>
    %111 = arith.addf %106, %110 : vector<8x8x64xf32>
    %c4_72 = arith.constant 4 : index
    %c1_73 = arith.constant 1 : index
    %c0_74 = arith.constant 0 : index
    %112 = tpu.strided_load %arg11[%c4_72, %c1_73, %c0_74] {strides = array<i32: 2, 2, 1>} : memref<20x20x64xf32, #tpu.memory_space<vmem>>, vector<8x8x64xf32>
    %113 = vector.extract_strided_slice %5 {offsets = [4, 1, 0], sizes = [1, 1, 64], strides = [1, 1, 1]} : vector<5x5x64xf32> to vector<1x1x64xf32>
    %114 = vector.broadcast %113 : vector<1x1x64xf32> to vector<8x8x64xf32>
    %115 = arith.mulf %112, %114 : vector<8x8x64xf32>
    %116 = arith.addf %111, %115 : vector<8x8x64xf32>
    %c4_75 = arith.constant 4 : index
    %c2_76 = arith.constant 2 : index
    %c0_77 = arith.constant 0 : index
    %117 = tpu.strided_load %arg11[%c4_75, %c2_76, %c0_77] {strides = array<i32: 2, 2, 1>} : memref<20x20x64xf32, #tpu.memory_space<vmem>>, vector<8x8x64xf32>
    %118 = vector.extract_strided_slice %5 {offsets = [4, 2, 0], sizes = [1, 1, 64], strides = [1, 1, 1]} : vector<5x5x64xf32> to vector<1x1x64xf32>
    %119 = vector.broadcast %118 : vector<1x1x64xf32> to vector<8x8x64xf32>
    %120 = arith.mulf %117, %119 : vector<8x8x64xf32>
    %121 = arith.addf %116, %120 : vector<8x8x64xf32>
    %c4_78 = arith.constant 4 : index
    %c3_79 = arith.constant 3 : index
    %c0_80 = arith.constant 0 : index
    %122 = tpu.strided_load %arg11[%c4_78, %c3_79, %c0_80] {strides = array<i32: 2, 2, 1>} : memref<20x20x64xf32, #tpu.memory_space<vmem>>, vector<8x8x64xf32>
    %123 = vector.extract_strided_slice %5 {offsets = [4, 3, 0], sizes = [1, 1, 64], strides = [1, 1, 1]} : vector<5x5x64xf32> to vector<1x1x64xf32>
    %124 = vector.broadcast %123 : vector<1x1x64xf32> to vector<8x8x64xf32>
    %125 = arith.mulf %122, %124 : vector<8x8x64xf32>
    %126 = arith.addf %121, %125 : vector<8x8x64xf32>
    %c4_81 = arith.constant 4 : index
    %c4_82 = arith.constant 4 : index
    %c0_83 = arith.constant 0 : index
    %127 = tpu.strided_load %arg11[%c4_81, %c4_82, %c0_83] {strides = array<i32: 2, 2, 1>} : memref<20x20x64xf32, #tpu.memory_space<vmem>>, vector<8x8x64xf32>
    %128 = vector.extract_strided_slice %5 {offsets = [4, 4, 0], sizes = [1, 1, 64], strides = [1, 1, 1]} : vector<5x5x64xf32> to vector<1x1x64xf32>
    %129 = vector.broadcast %128 : vector<1x1x64xf32> to vector<8x8x64xf32>
    %130 = arith.mulf %127, %129 : vector<8x8x64xf32>
    %131 = arith.addf %126, %130 : vector<8x8x64xf32>
    %c0_84 = arith.constant 0 : index
    %c0_85 = arith.constant 0 : index
    %132 = vector.load %arg3[%c0_84, %c0_85] : memref<1x64xf32, #tpu.memory_space<vmem>>, vector<1x64xf32>
    %133 = vector.shape_cast %132 : vector<1x64xf32> to vector<1x1x64xf32>
    %134 = vector.broadcast %133 : vector<1x1x64xf32> to vector<8x8x64xf32>
    %135 = arith.mulf %131, %134 : vector<8x8x64xf32>
    %c0_86 = arith.constant 0 : index
    %c0_87 = arith.constant 0 : index
    %136 = vector.load %arg4[%c0_86, %c0_87] : memref<1x64xf32, #tpu.memory_space<vmem>>, vector<1x64xf32>
    %137 = vector.shape_cast %136 : vector<1x64xf32> to vector<1x1x64xf32>
    %138 = vector.broadcast %137 : vector<1x1x64xf32> to vector<8x8x64xf32>
    %139 = arith.addf %135, %138 : vector<8x8x64xf32>
    %cst_88 = arith.constant 3.000000e+00 : f32
    %140 = vector.broadcast %cst_88 : f32 to vector<8x8x64xf32>
    %141 = arith.addf %139, %140 : vector<8x8x64xf32>
    %cst_89 = arith.constant 0.000000e+00 : f32
    %cst_90 = arith.constant 6.000000e+00 : f32
    %142 = vector.broadcast %cst_89 : f32 to vector<8x8x64xf32>
    %143 = arith.maximumf %142, %141 : vector<8x8x64xf32>
    %144 = vector.broadcast %cst_90 : f32 to vector<8x8x64xf32>
    %145 = arith.minimumf %144, %143 : vector<8x8x64xf32>
    %146 = arith.mulf %139, %145 : vector<8x8x64xf32>
    %cst_91 = arith.constant 0.166666672 : f32
    %147 = vector.broadcast %cst_91 : f32 to vector<8x8x64xf32>
    %148 = arith.mulf %146, %147 : vector<8x8x64xf32>
    %149 = vector.shape_cast %148 : vector<8x8x64xf32> to vector<64x64xf32>
    %150 = arith.truncf %149 : vector<64x64xf32> to vector<64x64xbf16>
    %c0_92 = arith.constant 0 : index
    %c0_93 = arith.constant 0 : index
    %151 = vector.load %arg5[%c0_92, %c0_93] : memref<64x128xf32, #tpu.memory_space<vmem>>, vector<64x128xf32>
    %152 = arith.truncf %151 : vector<64x128xf32> to vector<64x128xbf16>
    %cst_94 = arith.constant dense<0.000000e+00> : vector<64x128xf32>
    %153 = tpu.matmul %150, %152, %cst_94 {dimension_numbers = #tpu.dot_dimension_numbers<[1], [0], [0], [1], [0, 0, 1, 1], [], []>} : vector<64x64xbf16>, vector<64x128xbf16>, vector<64x128xf32> -> vector<64x128xf32>
    %c0_95 = arith.constant 0 : index
    %c0_96 = arith.constant 0 : index
    %154 = vector.load %arg6[%c0_95, %c0_96] : memref<1x128xf32, #tpu.memory_space<vmem>>, vector<1x128xf32>
    %155 = vector.broadcast %154 : vector<1x128xf32> to vector<64x128xf32>
    %156 = arith.mulf %153, %155 : vector<64x128xf32>
    %c0_97 = arith.constant 0 : index
    %c0_98 = arith.constant 0 : index
    %157 = vector.load %arg7[%c0_97, %c0_98] : memref<1x128xf32, #tpu.memory_space<vmem>>, vector<1x128xf32>
    %158 = vector.broadcast %157 : vector<1x128xf32> to vector<64x128xf32>
    %159 = arith.addf %156, %158 : vector<64x128xf32>
    %cst_99 = arith.constant 3.000000e+00 : f32
    %160 = vector.broadcast %cst_99 : f32 to vector<64x128xf32>
    %161 = arith.addf %159, %160 : vector<64x128xf32>
    %cst_100 = arith.constant 0.000000e+00 : f32
    %cst_101 = arith.constant 6.000000e+00 : f32
    %162 = vector.broadcast %cst_100 : f32 to vector<64x128xf32>
    %163 = arith.maximumf %162, %161 : vector<64x128xf32>
    %164 = vector.broadcast %cst_101 : f32 to vector<64x128xf32>
    %165 = arith.minimumf %164, %163 : vector<64x128xf32>
    %166 = arith.mulf %159, %165 : vector<64x128xf32>
    %cst_102 = arith.constant 0.166666672 : f32
    %167 = vector.broadcast %cst_102 : f32 to vector<64x128xf32>
    %168 = arith.mulf %166, %167 : vector<64x128xf32>
    %cst_103 = arith.constant dense<0.000000e+00> : vector<128xf32>
    %169 = vector.multi_reduction <add>, %168, %cst_103 [0] : vector<64x128xf32> to vector<128xf32>
    %170 = vector.shape_cast %169 : vector<128xf32> to vector<1x128xf32>
    %cst_104 = arith.constant 1.562500e-02 : f32
    %171 = vector.broadcast %cst_104 : f32 to vector<1x128xf32>
    %172 = arith.mulf %170, %171 : vector<1x128xf32>
    %c0_105 = arith.constant 0 : index
    %c0_106 = arith.constant 0 : index
    %173 = vector.load %arg8[%c0_105, %c0_106] : memref<128x8xf32, #tpu.memory_space<vmem>>, vector<128x8xf32>
    %cst_107 = arith.constant dense<0.000000e+00> : vector<1x8xf32>
    %174 = tpu.matmul %172, %173, %cst_107 {dimension_numbers = #tpu.dot_dimension_numbers<[1], [0], [0], [1], [0, 0, 1, 1], [], []>} : vector<1x128xf32>, vector<128x8xf32>, vector<1x8xf32> -> vector<1x8xf32>
    %cst_108 = arith.constant 0.000000e+00 : f32
    %175 = vector.broadcast %cst_108 : f32 to vector<1x8xf32>
    %176 = arith.maximumf %174, %175 : vector<1x8xf32>
    %c0_109 = arith.constant 0 : index
    %c0_110 = arith.constant 0 : index
    %177 = vector.load %arg9[%c0_109, %c0_110] : memref<8x128xf32, #tpu.memory_space<vmem>>, vector<8x128xf32>
    %cst_111 = arith.constant dense<0.000000e+00> : vector<1x128xf32>
    %178 = tpu.matmul %176, %177, %cst_111 {dimension_numbers = #tpu.dot_dimension_numbers<[1], [0], [0], [1], [0, 0, 1, 1], [], []>} : vector<1x8xf32>, vector<8x128xf32>, vector<1x128xf32> -> vector<1x128xf32>
    %cst_112 = arith.constant 3.000000e+00 : f32
    %179 = vector.broadcast %cst_112 : f32 to vector<1x128xf32>
    %180 = arith.addf %178, %179 : vector<1x128xf32>
    %cst_113 = arith.constant 0.000000e+00 : f32
    %cst_114 = arith.constant 6.000000e+00 : f32
    %181 = vector.broadcast %cst_113 : f32 to vector<1x128xf32>
    %182 = arith.maximumf %181, %180 : vector<1x128xf32>
    %183 = vector.broadcast %cst_114 : f32 to vector<1x128xf32>
    %184 = arith.minimumf %183, %182 : vector<1x128xf32>
    %185 = arith.mulf %178, %184 : vector<1x128xf32>
    %cst_115 = arith.constant 0.166666672 : f32
    %186 = vector.broadcast %cst_115 : f32 to vector<1x128xf32>
    %187 = arith.mulf %185, %186 : vector<1x128xf32>
    %188 = arith.mulf %178, %187 : vector<1x128xf32>
    %189 = vector.broadcast %188 : vector<1x128xf32> to vector<64x128xf32>
    %190 = arith.mulf %168, %189 : vector<64x128xf32>
    %191 = vector.shape_cast %190 : vector<64x128xf32> to vector<8x8x128xf32>
    %c0_116 = arith.constant 0 : index
    %c0_117 = arith.constant 0 : index
    %c0_118 = arith.constant 0 : index
    %c0_119 = arith.constant 0 : index
    %192 = vector.load %arg10[%c0_116, %c0_117, %c0_118, %c0_119] : memref<1x8x8x128xf32, #tpu.memory_space<vmem>>, vector<1x8x8x128xf32>
    %193 = vector.shape_cast %192 : vector<1x8x8x128xf32> to vector<8x8x128xf32>
    %194 = vector.shape_cast %191 : vector<8x8x128xf32> to vector<1x8x8x128xf32>
    tpu.vector_store %arg10[%c0_116, %c0_117, %c0_118, %c0_119], %194 {strides = array<i32>} : memref<1x8x8x128xf32, #tpu.memory_space<vmem>>, vector<1x8x8x128xf32>,
    return
  }
  func.func @transform_0(%arg0: i32) -> (i32, i32, i32, i32) {
    %c0_i32 = arith.constant 0 : i32
    %c0_i32_0 = arith.constant 0 : i32
    %c0_i32_1 = arith.constant 0 : i32
    %c0_i32_2 = arith.constant 0 : i32
    return %arg0, %c0_i32, %c0_i32_0, %c0_i32_1 : i32, i32, i32, i32
  }
  func.func @transform_1(%arg0: i32) -> (i32, i32, i32) {
    %c0_i32 = arith.constant 0 : i32
    %c0_i32_0 = arith.constant 0 : i32
    %c0_i32_1 = arith.constant 0 : i32
    %c0_i32_2 = arith.constant 0 : i32
    return %c0_i32, %c0_i32_0, %c0_i32_1 : i32, i32, i32
  }
  func.func @transform_2(%arg0: i32) -> (i32, i32) {
    %c0_i32 = arith.constant 0 : i32
    %c0_i32_0 = arith.constant 0 : i32
    %c0_i32_1 = arith.constant 0 : i32
    return %c0_i32, %c0_i32_0 : i32, i32
  }
  func.func @transform_3(%arg0: i32) -> (i32, i32) {
    %c0_i32 = arith.constant 0 : i32
    %c0_i32_0 = arith.constant 0 : i32
    %c0_i32_1 = arith.constant 0 : i32
    return %c0_i32, %c0_i32_0 : i32, i32
  }
  func.func @transform_4(%arg0: i32) -> (i32, i32) {
    %c0_i32 = arith.constant 0 : i32
    %c0_i32_0 = arith.constant 0 : i32
    %c0_i32_1 = arith.constant 0 : i32
    return %c0_i32, %c0_i32_0 : i32, i32
  }
  func.func @transform_5(%arg0: i32) -> (i32, i32) {
    %c0_i32 = arith.constant 0 : i32
    %c0_i32_0 = arith.constant 0 : i32
    %c0_i32_1 = arith.constant 0 : i32
    return %c0_i32, %c0_i32_0 : i32, i32
  }
  func.func @transform_6(%arg0: i32) -> (i32, i32) {
    %c0_i32 = arith.constant 0 : i32
    %c0_i32_0 = arith.constant 0 : i32
    %c0_i32_1 = arith.constant 0 : i32
    return %c0_i32, %c0_i32_0 : i32, i32
  }
  func.func @transform_7(%arg0: i32) -> (i32, i32) {
    %c0_i32 = arith.constant 0 : i32
    %c0_i32_0 = arith.constant 0 : i32
    %c0_i32_1 = arith.constant 0 : i32
    return %c0_i32, %c0_i32_0 : i32, i32
  }
  func.func @transform_8(%arg0: i32) -> (i32, i32) {
    %c0_i32 = arith.constant 0 : i32
    %c0_i32_0 = arith.constant 0 : i32
    %c0_i32_1 = arith.constant 0 : i32
    return %c0_i32, %c0_i32_0 : i32, i32
  }
  func.func @transform_9(%arg0: i32) -> (i32, i32, i32, i32) {
    %c0_i32 = arith.constant 0 : i32
    %c0_i32_0 = arith.constant 0 : i32
    %c0_i32_1 = arith.constant 0 : i32
    %c0_i32_2 = arith.constant 0 : i32
    return %arg0, %c0_i32, %c0_i32_0, %c0_i32_1 : i32, i32, i32, i32
  }
}

</mosaic_0001>

<llo_original>
// kernel: tpu_custom_call.1
$region0: #{tpu_custom_call.1}
  #allocation0 [shape = 'u32[]', space=smem, size = 0x4, offset = 0x4, fixed_abs, tag = 'smem constant byte address 0x4 - core index']
  #allocation1 [shape = 'u32[144,128]{1,0:T(1,128)}', space=vmem, size = 0x12000, scoped, tag = 'internal scratch']
  #allocation2 [shape = 'f32[20,20,64]{2,1,0:T(8,128)}', space=vmem, size = 0x3c000, scoped, tag = 'scratch operand']
  %s0 = inlined_call_operand.hbm [shape: f32[2,16,16,64], index: 0, kind: input, shape index: {}]
  %s1 = inlined_call_operand.vmem [shape: f32[5,5,64], index: 1, kind: input, shape index: {}]
  %s2 = inlined_call_operand.vmem [shape: f32[1,64], index: 2, kind: input, shape index: {}]
  %s3 = inlined_call_operand.vmem [shape: f32[1,64], index: 3, kind: input, shape index: {}]
  %s4 = inlined_call_operand.vmem [shape: f32[64,128], index: 4, kind: input, shape index: {}]
  %s5 = inlined_call_operand.vmem [shape: f32[1,128], index: 5, kind: input, shape index: {}]
  %s6 = inlined_call_operand.vmem [shape: f32[1,128], index: 6, kind: input, shape index: {}]
  %s7 = inlined_call_operand.vmem [shape: f32[128,8], index: 7, kind: input, shape index: {}]
  %s8 = inlined_call_operand.vmem [shape: f32[8,128], index: 8, kind: input, shape index: {}]
  %s9 = inlined_call_operand.hbm [shape: f32[2,8,8,128], index: 9, kind: output, shape index: {}]
  %s10 = sld [smem:[#allocation0]]
  $region73: #{tpu_custom_call.1} parent=0
    _
  %s12 = ssub.s32 1, %s10
  %s13 = scalar_select 0, %s12, %s10
  $region1: #{tpu_custom_call.1} parent=0
    #allocation3 [shape = 'u8[262144]{0}', space=vmem, size = 0x40000, scoped, tag = 'input window, operand 0']
    #allocation4 [shape = 's32[2]{0}', space=sflag, size = 0x8, scoped, tag = 'scoped memory for tpu_custom_call.1']
    #allocation5 [shape = 's32[2]{0}', space=sflag, size = 0x8, scoped, tag = 'scoped memory for tpu_custom_call.1']
    #allocation6 [shape = 'u8[65536]{0}', space=vmem, size = 0x10000, scoped, tag = 'output window, operand 0']
    %14 = vsyncpa [#allocation4], 0
    %s15 = scalar_lea.sflag [#allocation4], 1
    %16 = vsyncpa %s15, 0
    %17 = vsyncpa [#allocation5], 0
    %s18 = scalar_lea.sflag [#allocation5], 1
    %19 = vsyncpa %s18, 0
    loop: start=0, step=1, limit=4
    $region2: #{tpu_custom_call.1} parent=1 // loop_pre_header
      _
    $region3: #{tpu_custom_call.1} parent=1 // loop_header
      %s21 = sphi 0, %s25
      %p22 = scmp.ge.s32.totalorder %s21, 4
      %s31 = sphi 0, %s33
      %s34 = sphi 0, %s31
      %s35 = sphi 0, %s34
      %s51 = sphi 0, %s35
      %s55 = sphi 0, %s55
      %s57 = sphi 0, %s55
      %s58 = sphi 0, %s57
      %s72 = sphi 0, %s58
      %s76 = sphi 0, %s76
      %s78 = sphi 0, %s76
      %s79 = sphi 0, %s78
      %s93 = sphi 0, %s79
      %s97 = sphi 0, %s97
      %s99 = sphi 0, %s97
      %s100 = sphi 0, %s99
      %s114 = sphi 0, %s100
      %s118 = sphi 0, %s118
      %s120 = sphi 0, %s118
      %s121 = sphi 0, %s120
      %s135 = sphi 0, %s121
      %s139 = sphi 0, %s139
      %s141 = sphi 0, %s139
      %s142 = sphi 0, %s141
      %s156 = sphi 0, %s142
      %s160 = sphi 0, %s160
      %s162 = sphi 0, %s160
      %s163 = sphi 0, %s162
      %s177 = sphi 0, %s163
      %s181 = sphi 0, %s181
      %s183 = sphi 0, %s181
      %s184 = sphi 0, %s183
      %s198 = sphi 0, %s184
      %s202 = sphi 0, %s202
      %s204 = sphi 0, %s202
      %s205 = sphi 0, %s204
      %s219 = sphi 0, %s205
      %s225 = sphi 0, %s227
      %s228 = sphi 0, %s225
      %s229 = sphi 0, %s228
      %s245 = sphi 0, %s229
    $region4: #{tpu_custom_call.1} parent=1 // loop_header_branch
      %24 = sbr.rel (%p22) target = $region8
    $region5: #{tpu_custom_call.1} parent=1 // loop_body
      %s26 = ssub.s32 %s21, 1
      %s27 = ssub.s32 %s21, 2
      %s28 = sadd.s32 %s21, 1
      %s29 = ssub.s32 %s21, %s28
      %p30 = scmp.eq.s32.totalorder %s29, 0
      %s32 = sadd.s32 %s31, 1
      %s33 = scalar_select %p30, %s31, %s32
      %p36 = pneg %p30
      %p37 = scmp.eq.s32.totalorder %s21, 1
      %p38 = por %p36, %p37
      %p39 = scmp.ne.s32.totalorder %s31, %s34
      %p40 = scmp.eq.s32.totalorder %s21, 0
      %p41 = por %p39, %p40
      %p42 = scmp.ne.s32.totalorder %s31, %s34
      %p43 = scmp.eq.s32.totalorder %s26, 1
      %p44 = por %p42, %p43
      %p45 = scmp.ne.s32.totalorder %s34, %s35
      %p46 = scmp.eq.s32.totalorder %s26, 0
      %p47 = por %p45, %p46
      %p48 = scmp.ne.s32.totalorder %s34, %s35
      %p49 = scmp.eq.s32.totalorder %s27, 1
      %p50 = por %p48, %p49
      %p52 = scmp.ne.s32.totalorder %s35, %s51
      %p53 = scmp.eq.s32.totalorder %s27, 0
      %p54 = por %p52, %p53
      %s56 = sadd.s32 %s55, 1
      %p59 = scmp.eq.s32.totalorder %s21, 1
      %p60 = scmp.ne.s32.totalorder %s55, %s57
      %p61 = scmp.eq.s32.totalorder %s21, 0
      %p62 = por %p60, %p61
      %p63 = scmp.ne.s32.totalorder %s55, %s57
      %p64 = scmp.eq.s32.totalorder %s26, 1
      %p65 = por %p63, %p64
      %p66 = scmp.ne.s32.totalorder %s57, %s58
      %p67 = scmp.eq.s32.totalorder %s26, 0
      %p68 = por %p66, %p67
      %p69 = scmp.ne.s32.totalorder %s57, %s58
      %p70 = scmp.eq.s32.totalorder %s27, 1
      %p71 = por %p69, %p70
      %p73 = scmp.ne.s32.totalorder %s58, %s72
      %p74 = scmp.eq.s32.totalorder %s27, 0
      %p75 = por %p73, %p74
      %s77 = sadd.s32 %s76, 1
      %p80 = scmp.eq.s32.totalorder %s21, 1
      %p81 = scmp.ne.s32.totalorder %s76, %s78
      %p82 = scmp.eq.s32.totalorder %s21, 0
      %p83 = por %p81, %p82
      %p84 = scmp.ne.s32.totalorder %s76, %s78
      %p85 = scmp.eq.s32.totalorder %s26, 1
      %p86 = por %p84, %p85
      %p87 = scmp.ne.s32.totalorder %s78, %s79
      %p88 = scmp.eq.s32.totalorder %s26, 0
      %p89 = por %p87, %p88
      %p90 = scmp.ne.s32.totalorder %s78, %s79
      %p91 = scmp.eq.s32.totalorder %s27, 1
      %p92 = por %p90, %p91
      %p94 = scmp.ne.s32.totalorder %s79, %s93
      %p95 = scmp.eq.s32.totalorder %s27, 0
      %p96 = por %p94, %p95
      %s98 = sadd.s32 %s97, 1
      %p101 = scmp.eq.s32.totalorder %s21, 1
      %p102 = scmp.ne.s32.totalorder %s97, %s99
      %p103 = scmp.eq.s32.totalorder %s21, 0
      %p104 = por %p102, %p103
      %p105 = scmp.ne.s32.totalorder %s97, %s99
      %p106 = scmp.eq.s32.totalorder %s26, 1
      %p107 = por %p105, %p106
      %p108 = scmp.ne.s32.totalorder %s99, %s100
      %p109 = scmp.eq.s32.totalorder %s26, 0
      %p110 = por %p108, %p109
      %p111 = scmp.ne.s32.totalorder %s99, %s100
      %p112 = scmp.eq.s32.totalorder %s27, 1
      %p113 = por %p111, %p112
      %p115 = scmp.ne.s32.totalorder %s100, %s114
      %p116 = scmp.eq.s32.totalorder %s27, 0
      %p117 = por %p115, %p116
      %s119 = sadd.s32 %s118, 1
      %p122 = scmp.eq.s32.totalorder %s21, 1
      %p123 = scmp.ne.s32.totalorder %s118, %s120
      %p124 = scmp.eq.s32.totalorder %s21, 0
      %p125 = por %p123, %p124
      %p126 = scmp.ne.s32.totalorder %s118, %s120
      %p127 = scmp.eq.s32.totalorder %s26, 1
      %p128 = por %p126, %p127
      %p129 = scmp.ne.s32.totalorder %s120, %s121
      %p130 = scmp.eq.s32.totalorder %s26, 0
      %p131 = por %p129, %p130
      %p132 = scmp.ne.s32.totalorder %s120, %s121
      %p133 = scmp.eq.s32.totalorder %s27, 1
      %p134 = por %p132, %p133
      %p136 = scmp.ne.s32.totalorder %s121, %s135
      %p137 = scmp.eq.s32.totalorder %s27, 0
      %p138 = por %p136, %p137
      %s140 = sadd.s32 %s139, 1
      %p143 = scmp.eq.s32.totalorder %s21, 1
      %p144 = scmp.ne.s32.totalorder %s139, %s141
      %p145 = scmp.eq.s32.totalorder %s21, 0
      %p146 = por %p144, %p145
      %p147 = scmp.ne.s32.totalorder %s139, %s141
      %p148 = scmp.eq.s32.totalorder %s26, 1
      %p149 = por %p147, %p148
      %p150 = scmp.ne.s32.totalorder %s141, %s142
      %p151 = scmp.eq.s32.totalorder %s26, 0
      %p152 = por %p150, %p151
      %p153 = scmp.ne.s32.totalorder %s141, %s142
      %p154 = scmp.eq.s32.totalorder %s27, 1
      %p155 = por %p153, %p154
      %p157 = scmp.ne.s32.totalorder %s142, %s156
      %p158 = scmp.eq.s32.totalorder %s27, 0
      %p159 = por %p157, %p158
      %s161 = sadd.s32 %s160, 1
      %p164 = scmp.eq.s32.totalorder %s21, 1
      %p165 = scmp.ne.s32.totalorder %s160, %s162
      %p166 = scmp.eq.s32.totalorder %s21, 0
      %p167 = por %p165, %p166
      %p168 = scmp.ne.s32.totalorder %s160, %s162
      %p169 = scmp.eq.s32.totalorder %s26, 1
      %p170 = por %p168, %p169
      %p171 = scmp.ne.s32.totalorder %s162, %s163
      %p172 = scmp.eq.s32.totalorder %s26, 0
      %p173 = por %p171, %p172
      %p174 = scmp.ne.s32.totalorder %s162, %s163
      %p175 = scmp.eq.s32.totalorder %s27, 1
      %p176 = por %p174, %p175
      %p178 = scmp.ne.s32.totalorder %s163, %s177
      %p179 = scmp.eq.s32.totalorder %s27, 0
      %p180 = por %p178, %p179
      %s182 = sadd.s32 %s181, 1
      %p185 = scmp.eq.s32.totalorder %s21, 1
      %p186 = scmp.ne.s32.totalorder %s181, %s183
      %p187 = scmp.eq.s32.totalorder %s21, 0
      %p188 = por %p186, %p187
      %p189 = scmp.ne.s32.totalorder %s181, %s183
      %p190 = scmp.eq.s32.totalorder %s26, 1
      %p191 = por %p189, %p190
      %p192 = scmp.ne.s32.totalorder %s183, %s184
      %p193 = scmp.eq.s32.totalorder %s26, 0
      %p194 = por %p192, %p193
      %p195 = scmp.ne.s32.totalorder %s183, %s184
      %p196 = scmp.eq.s32.totalorder %s27, 1
      %p197 = por %p195, %p196
      %p199 = scmp.ne.s32.totalorder %s184, %s198
      %p200 = scmp.eq.s32.totalorder %s27, 0
      %p201 = por %p199, %p200
      %s203 = sadd.s32 %s202, 1
      %p206 = scmp.eq.s32.totalorder %s21, 1
      %p207 = scmp.ne.s32.totalorder %s202, %s204
      %p208 = scmp.eq.s32.totalorder %s21, 0
      %p209 = por %p207, %p208
      %p210 = scmp.ne.s32.totalorder %s202, %s204
      %p211 = scmp.eq.s32.totalorder %s26, 1
      %p212 = por %p210, %p211
      %p213 = scmp.ne.s32.totalorder %s204, %s205
      %p214 = scmp.eq.s32.totalorder %s26, 0
      %p215 = por %p213, %p214
      %p216 = scmp.ne.s32.totalorder %s204, %s205
      %p217 = scmp.eq.s32.totalorder %s27, 1
      %p218 = por %p216, %p217
      %p220 = scmp.ne.s32.totalorder %s205, %s219
      %p221 = scmp.eq.s32.totalorder %s27, 0
      %p222 = por %p220, %p221
      %s223 = ssub.s32 %s21, %s28
      %p224 = scmp.eq.s32.totalorder %s223, 0
      %s226 = sadd.s32 %s225, 1
      %s227 = scalar_select %p224, %s225, %s226
      %p230 = pneg %p224
      %p231 = scmp.eq.s32.totalorder %s21, 1
      %p232 = por %p230, %p231
      %p233 = scmp.ne.s32.totalorder %s225, %s228
      %p234 = scmp.eq.s32.totalorder %s21, 0
      %p235 = por %p233, %p234
      %p236 = scmp.ne.s32.totalorder %s225, %s228
      %p237 = scmp.eq.s32.totalorder %s26, 1
      %p238 = por %p236, %p237
      %p239 = scmp.ne.s32.totalorder %s228, %s229
      %p240 = scmp.eq.s32.totalorder %s26, 0
      %p241 = por %p239, %p240
      %p242 = scmp.ne.s32.totalorder %s228, %s229
      %p243 = scmp.eq.s32.totalorder %s27, 1
      %p244 = por %p242, %p243
      %p246 = scmp.ne.s32.totalorder %s229, %s245
      %p247 = scmp.eq.s32.totalorder %s27, 0
      %p248 = por %p246, %p247
      %p249 = scmp.le.s32.totalorder 1, %s21
      %p250 = scmp.lt.s32.totalorder %s21, 3
      %p251 = pnand %p249, %p250
      %p252 = pneg %p251
      // Predicated region
      $region9: #{tpu_custom_call.1} parent=5 // pred_check
        _
      $region10: #{tpu_custom_call.1} parent=5 // pred_check_branch
        %254 = sbr.rel (%p251) target = $region12
      $region11: #{tpu_custom_call.1} parent=5 // pred_region
        %s255 = ssub.s32 %s21, 1
        // Predicated region
        $region13: #{tpu_custom_call.1} parent=11 // pred_check
          %p256 = pneg %p68
        $region14: #{tpu_custom_call.1} parent=11 // pred_check_branch
          %258 = sbr.rel (%p256) target = $region16
        $region15: #{tpu_custom_call.1} parent=11 // pred_region
          _
        $region16: #{tpu_custom_call.1} parent=11 // pred_fallthru
          _
        // Predicated region
        $region17: #{tpu_custom_call.1} parent=11 // pred_check
          %p259 = pneg %p89
        $region18: #{tpu_custom_call.1} parent=11 // pred_check_branch
          %261 = sbr.rel (%p259) target = $region20
        $region19: #{tpu_custom_call.1} parent=11 // pred_region
          _
        $region20: #{tpu_custom_call.1} parent=11 // pred_fallthru
          _
        // Predicated region
        $region21: #{tpu_custom_call.1} parent=11 // pred_check
          %p262 = pneg %p110
        $region22: #{tpu_custom_call.1} parent=11 // pred_check_branch
          %264 = sbr.rel (%p262) target = $region24
        $region23: #{tpu_custom_call.1} parent=11 // pred_region
          _
        $region24: #{tpu_custom_call.1} parent=11 // pred_fallthru
          _
        // Predicated region
        $region25: #{tpu_custom_call.1} parent=11 // pred_check
          %p265 = pneg %p131
        $region26: #{tpu_custom_call.1} parent=11 // pred_check_branch
          %267 = sbr.rel (%p265) target = $region28
        $region27: #{tpu_custom_call.1} parent=11 // pred_region
          _
        $region28: #{tpu_custom_call.1} parent=11 // pred_fallthru
          _
        // Predicated region
        $region29: #{tpu_custom_call.1} parent=11 // pred_check
          %p268 = pneg %p152
        $region30: #{tpu_custom_call.1} parent=11 // pred_check_branch
          %270 = sbr.rel (%p268) target = $region32
        $region31: #{tpu_custom_call.1} parent=11 // pred_region
          _
        $region32: #{tpu_custom_call.1} parent=11 // pred_fallthru
          _
        // Predicated region
        $region33: #{tpu_custom_call.1} parent=11 // pred_check
          %p271 = pneg %p173
        $region34: #{tpu_custom_call.1} parent=11 // pred_check_branch
          %273 = sbr.rel (%p271) target = $region36
        $region35: #{tpu_custom_call.1} parent=11 // pred_region
          _
        $region36: #{tpu_custom_call.1} parent=11 // pred_fallthru
          _
        // Predicated region
        $region37: #{tpu_custom_call.1} parent=11 // pred_check
          %p274 = pneg %p194
        $region38: #{tpu_custom_call.1} parent=11 // pred_check_branch
          %276 = sbr.rel (%p274) target = $region40
        $region39: #{tpu_custom_call.1} parent=11 // pred_region
          _
        $region40: #{tpu_custom_call.1} parent=11 // pred_fallthru
          _
        // Predicated region
        $region41: #{tpu_custom_call.1} parent=11 // pred_check
          %p277 = pneg %p215
        $region42: #{tpu_custom_call.1} parent=11 // pred_check_branch
          %279 = sbr.rel (%p277) target = $region44
        $region43: #{tpu_custom_call.1} parent=11 // pred_region
          _
        $region44: #{tpu_custom_call.1} parent=11 // pred_fallthru
          _
      $region12: #{tpu_custom_call.1} parent=5 // pred_fallthru
        _
      %p280 = scmp.lt.s32.totalorder %s21, 2
      // Predicated region
      $region45: #{tpu_custom_call.1} parent=5 // pred_check
        %p281 = pneg %p280
      $region46: #{tpu_custom_call.1} parent=5 // pred_check_branch
        %283 = sbr.rel (%p281) target = $region48
      $region47: #{tpu_custom_call.1} parent=5 // pred_region
        // Predicated region
        $region49: #{tpu_custom_call.1} parent=47 // pred_check
          %p284 = pneg %p41
        $region50: #{tpu_custom_call.1} parent=47 // pred_check_branch
          %286 = sbr.rel (%p284) target = $region52
        $region51: #{tpu_custom_call.1} parent=47 // pred_region
          %s287 = sand.u32 %s31, 1
          %s288 = scalar_lea.sflag [#allocation4], %s287
          %s289 = sand.u32 %s31, 1
          %s290 = smul.addr %s289, 256
          %s291 = scalar_lea.vmem [#allocation3], %s290
          %s293 = ssub.s32 4096, 4096
          %294 = vsyncadd %s288, %s293
          %s295 = smul.addr %s21, 32
          %s296 = smul.addr %s295, 128
          %s297 = scalar_lea.hbm %s0, %s296
          %s298 = sshll.u32 %s291, 4
          %s299 = int_to_ptr.vmem [resolvable:$true] %s298
          %304 = dma.hbm_to_vmem [thread:$0]  %s297, 4096, %s299, %s288, 128, 128, 8
        $region52: #{tpu_custom_call.1} parent=47 // pred_fallthru
          _
      $region48: #{tpu_custom_call.1} parent=5 // pred_fallthru
        _
      %p305 = scmp.le.s32.totalorder 1, %s21
      %p306 = scmp.lt.s32.totalorder %s21, 3
      %p307 = pnand %p305, %p306
      %p308 = pneg %p307
      // Predicated region
      $region53: #{tpu_custom_call.1} parent=5 // pred_check
        _
      $region54: #{tpu_custom_call.1} parent=5 // pred_check_branch
        %310 = sbr.rel (%p307) target = $region56
      $region55: #{tpu_custom_call.1} parent=5 // pred_region
        %s311 = ssub.s32 %s21, 1
        %s312 = sand.u32 %s34, 1
        %s313 = scalar_lea.sflag [#allocation4], %s312
        %s314 = sand.u32 %s34, 1
        %s315 = smul.addr %s314, 256
        %s316 = scalar_lea.vmem [#allocation3], %s315
        // Predicated region
        $region57: #{tpu_custom_call.1} parent=55 // pred_check
          %p317 = pneg %p47
        $region58: #{tpu_custom_call.1} parent=55 // pred_check_branch
          %319 = sbr.rel (%p317) target = $region60
        $region59: #{tpu_custom_call.1} parent=55 // pred_region
          %320 = dma.done %s313, 4096
        $region60: #{tpu_custom_call.1} parent=55 // pred_fallthru
          _
        %s321 = sand.u32 %s34, 1
        %s322 = scalar_lea.sflag [#allocation4], %s321
        %s323 = sand.u32 %s34, 1
        %s324 = smul.addr %s323, 256
        %s325 = scalar_lea.vmem [#allocation3], %s324
        %p326 = pneg %p47
        %p327 = pneg %p44
        %p328 = pneg %p68
        %p329 = pneg %p65
        %p330 = pneg %p89
        %p331 = pneg %p86
        %p332 = pneg %p110
        %p333 = pneg %p107
        %p334 = pneg %p131
        %p335 = pneg %p128
        %p336 = pneg %p152
        %p337 = pneg %p149
        %p338 = pneg %p173
        %p339 = pneg %p170
        %p340 = pneg %p194
        %p341 = pneg %p191
        %p342 = pneg %p215
        %p343 = pneg %p212
        %p344 = pneg %p241
        %p345 = pneg %p238
        %s346 = sand.u32 %s228, 1
        %s347 = scalar_lea.sflag [#allocation5], %s346
        %s348 = sand.u32 %s228, 1
        %s349 = smul.addr %s348, 64
        %s350 = scalar_lea.vmem [#allocation6], %s349
        %vm352 = vcmask 523264
        %353 = vst.msk [vmem:[#allocation2] sm:$0xff] %vm352, 0.0
        %354 = vst.msk [vmem:[#allocation2 + $0x8] sm:$0xff] %vm352, 0.0
        %vm355 = vcmask 519168
        %356 = vst.msk [vmem:[#allocation2 + $0x10] sm:$0xf] %vm355, 0.0
        %357 = vst.msk [vmem:[#allocation2 + $0x18] sm:$0xff] %vm352, 0.0
        %358 = vst.msk [vmem:[#allocation2 + $0x20] sm:$0xff] %vm352, 0.0
        %359 = vst.msk [vmem:[#allocation2 + $0x28] sm:$0xf] %vm355, 0.0
        %360 = vst.msk [vmem:[#allocation2 + $0x30] sm:$0xff] %vm352, 0.0
        %361 = vst.msk [vmem:[#allocation2 + $0x38] sm:$0xff] %vm352, 0.0
        %362 = vst.msk [vmem:[#allocation2 + $0x40] sm:$0xf] %vm355, 0.0
        %363 = vst.msk [vmem:[#allocation2 + $0x48] sm:$0xff] %vm352, 0.0
        %364 = vst.msk [vmem:[#allocation2 + $0x50] sm:$0xff] %vm352, 0.0
        %365 = vst.msk [vmem:[#allocation2 + $0x58] sm:$0xf] %vm355, 0.0
        %366 = vst.msk [vmem:[#allocation2 + $0x60] sm:$0xff] %vm352, 0.0
        %367 = vst.msk [vmem:[#allocation2 + $0x68] sm:$0xff] %vm352, 0.0
        %368 = vst.msk [vmem:[#allocation2 + $0x70] sm:$0xf] %vm355, 0.0
        %369 = vst.msk [vmem:[#allocation2 + $0x78] sm:$0xff] %vm352, 0.0
        %370 = vst.msk [vmem:[#allocation2 + $0x80] sm:$0xff] %vm352, 0.0
        %371 = vst.msk [vmem:[#allocation2 + $0x88] sm:$0xf] %vm355, 0.0
        %372 = vst.msk [vmem:[#allocation2 + $0x90] sm:$0xff] %vm352, 0.0
        %373 = vst.msk [vmem:[#allocation2 + $0x98] sm:$0xff] %vm352, 0.0
        %374 = vst.msk [vmem:[#allocation2 + $0xa0] sm:$0xf] %vm355, 0.0
        %375 = vst.msk [vmem:[#allocation2 + $0xa8] sm:$0xff] %vm352, 0.0
        %376 = vst.msk [vmem:[#allocation2 + $0xb0] sm:$0xff] %vm352, 0.0
        %377 = vst.msk [vmem:[#allocation2 + $0xb8] sm:$0xf] %vm355, 0.0
        %378 = vst.msk [vmem:[#allocation2 + $0xc0] sm:$0xff] %vm352, 0.0
        %379 = vst.msk [vmem:[#allocation2 + $0xc8] sm:$0xff] %vm352, 0.0
        %380 = vst.msk [vmem:[#allocation2 + $0xd0] sm:$0xf] %vm355, 0.0
        %381 = vst.msk [vmem:[#allocation2 + $0xd8] sm:$0xff] %vm352, 0.0
        %382 = vst.msk [vmem:[#allocation2 + $0xe0] sm:$0xff] %vm352, 0.0
        %383 = vst.msk [vmem:[#allocation2 + $0xe8] sm:$0xf] %vm355, 0.0
        %384 = vst.msk [vmem:[#allocation2 + $0xf0] sm:$0xff] %vm352, 0.0
        %385 = vst.msk [vmem:[#allocation2 + $0xf8] sm:$0xff] %vm352, 0.0
        %386 = vst.msk [vmem:[#allocation2 + $0x100] sm:$0xf] %vm355, 0.0
        %387 = vst.msk [vmem:[#allocation2 + $0x108] sm:$0xff] %vm352, 0.0
        %388 = vst.msk [vmem:[#allocation2 + $0x110] sm:$0xff] %vm352, 0.0
        %389 = vst.msk [vmem:[#allocation2 + $0x118] sm:$0xf] %vm355, 0.0
        %390 = vst.msk [vmem:[#allocation2 + $0x120] sm:$0xff] %vm352, 0.0
        %391 = vst.msk [vmem:[#allocation2 + $0x128] sm:$0xff] %vm352, 0.0
        %392 = vst.msk [vmem:[#allocation2 + $0x130] sm:$0xf] %vm355, 0.0
        %393 = vst.msk [vmem:[#allocation2 + $0x138] sm:$0xff] %vm352, 0.0
        %394 = vst.msk [vmem:[#allocation2 + $0x140] sm:$0xff] %vm352, 0.0
        %395 = vst.msk [vmem:[#allocation2 + $0x148] sm:$0xf] %vm355, 0.0
        %396 = vst.msk [vmem:[#allocation2 + $0x150] sm:$0xff] %vm352, 0.0
        %397 = vst.msk [vmem:[#allocation2 + $0x158] sm:$0xff] %vm352, 0.0
        %398 = vst.msk [vmem:[#allocation2 + $0x160] sm:$0xf] %vm355, 0.0
        %399 = vst.msk [vmem:[#allocation2 + $0x168] sm:$0xff] %vm352, 0.0
        %400 = vst.msk [vmem:[#allocation2 + $0x170] sm:$0xff] %vm352, 0.0
        %401 = vst.msk [vmem:[#allocation2 + $0x178] sm:$0xf] %vm355, 0.0
        %402 = vst.msk [vmem:[#allocation2 + $0x180] sm:$0xff] %vm352, 0.0
        %403 = vst.msk [vmem:[#allocation2 + $0x188] sm:$0xff] %vm352, 0.0
        %404 = vst.msk [vmem:[#allocation2 + $0x190] sm:$0xf] %vm355, 0.0
        %405 = vst.msk [vmem:[#allocation2 + $0x198] sm:$0xff] %vm352, 0.0
        %406 = vst.msk [vmem:[#allocation2 + $0x1a0] sm:$0xff] %vm352, 0.0
        %407 = vst.msk [vmem:[#allocation2 + $0x1a8] sm:$0xf] %vm355, 0.0
        %408 = vst.msk [vmem:[#allocation2 + $0x1b0] sm:$0xff] %vm352, 0.0
        %409 = vst.msk [vmem:[#allocation2 + $0x1b8] sm:$0xff] %vm352, 0.0
        %410 = vst.msk [vmem:[#allocation2 + $0x1c0] sm:$0xf] %vm355, 0.0
        %411 = vst.msk [vmem:[#allocation2 + $0x1c8] sm:$0xff] %vm352, 0.0
        %412 = vst.msk [vmem:[#allocation2 + $0x1d0] sm:$0xff] %vm352, 0.0
        %413 = vst.msk [vmem:[#allocation2 + $0x1d8] sm:$0xf] %vm355, 0.0
        %v414 = vld [vmem:[%s316] sm:$0xff]
        %v415 = vld [vmem:[%s316 + $0x8] sm:$0xff]
        %v416 = vld [vmem:[%s316 + $0x10] sm:$0xff]
        %v417 = vld [vmem:[%s316 + $0x18] sm:$0xff]
        %v418 = vld [vmem:[%s316 + $0x20] sm:$0xff]
        %v419 = vld [vmem:[%s316 + $0x28] sm:$0xff]
        %v420 = vld [vmem:[%s316 + $0x30] sm:$0xff]
        %v421 = vld [vmem:[%s316 + $0x38] sm:$0xff]
        %v422 = vld [vmem:[%s316 + $0x40] sm:$0xff]
        %v423 = vld [vmem:[%s316 + $0x48] sm:$0xff]
        %v424 = vld [vmem:[%s316 + $0x50] sm:$0xff]
        %v425 = vld [vmem:[%s316 + $0x58] sm:$0xff]
        %v426 = vld [vmem:[%s316 + $0x60] sm:$0xff]
        %v427 = vld [vmem:[%s316 + $0x68] sm:$0xff]
        %v428 = vld [vmem:[%s316 + $0x70] sm:$0xff]
        %v429 = vld [vmem:[%s316 + $0x78] sm:$0xff]
        %v430 = vld [vmem:[%s316 + $0x80] sm:$0xff]
        %v431 = vld [vmem:[%s316 + $0x88] sm:$0xff]
        %v432 = vld [vmem:[%s316 + $0x90] sm:$0xff]
        %v433 = vld [vmem:[%s316 + $0x98] sm:$0xff]
        %v434 = vld [vmem:[%s316 + $0xa0] sm:$0xff]
        %v435 = vld [vmem:[%s316 + $0xa8] sm:$0xff]
        %v436 = vld [vmem:[%s316 + $0xb0] sm:$0xff]
        %v437 = vld [vmem:[%s316 + $0xb8] sm:$0xff]
        %v438 = vld [vmem:[%s316 + $0xc0] sm:$0xff]
        %v439 = vld [vmem:[%s316 + $0xc8] sm:$0xff]
        %v440 = vld [vmem:[%s316 + $0xd0] sm:$0xff]
        %v441 = vld [vmem:[%s316 + $0xd8] sm:$0xff]
        %v442 = vld [vmem:[%s316 + $0xe0] sm:$0xff]
        %v443 = vld [vmem:[%s316 + $0xe8] sm:$0xff]
        %v444 = vld [vmem:[%s316 + $0xf0] sm:$0xff]
        %v445 = vld [vmem:[%s316 + $0xf8] sm:$0xff]
        %s446 = scalar_lea.vmem [#allocation2], 48
        %447 = vst.msk [vmem:[%s446 + $0x2] sm:$0xff] %vm352, %v414
        %448 = vst.msk [vmem:[%s446 + $0xa] sm:$0xff] %vm352, %v415
        %449 = vst.msk [vmem:[%s446 + $0x1a] sm:$0xff] %vm352, %v416
        %450 = vst.msk [vmem:[%s446 + $0x22] sm:$0xff] %vm352, %v417
        %451 = vst.msk [vmem:[%s446 + $0x32] sm:$0xff] %vm352, %v418
        %452 = vst.msk [vmem:[%s446 + $0x3a] sm:$0xff] %vm352, %v419
        %453 = vst.msk [vmem:[%s446 + $0x4a] sm:$0xff] %vm352, %v420
        %454 = vst.msk [vmem:[%s446 + $0x52] sm:$0xff] %vm352, %v421
        %455 = vst.msk [vmem:[%s446 + $0x62] sm:$0xff] %vm352, %v422
        %456 = vst.msk [vmem:[%s446 + $0x6a] sm:$0xff] %vm352, %v423
        %457 = vst.msk [vmem:[%s446 + $0x7a] sm:$0xff] %vm352, %v424
        %458 = vst.msk [vmem:[%s446 + $0x82] sm:$0xff] %vm352, %v425
        %459 = vst.msk [vmem:[%s446 + $0x92] sm:$0xff] %vm352, %v426
        %460 = vst.msk [vmem:[%s446 + $0x9a] sm:$0xff] %vm352, %v427
        %461 = vst.msk [vmem:[%s446 + $0xaa] sm:$0xff] %vm352, %v428
        %462 = vst.msk [vmem:[%s446 + $0xb2] sm:$0xff] %vm352, %v429
        %463 = vst.msk [vmem:[%s446 + $0xc2] sm:$0xff] %vm352, %v430
        %464 = vst.msk [vmem:[%s446 + $0xca] sm:$0xff] %vm352, %v431
        %465 = vst.msk [vmem:[%s446 + $0xda] sm:$0xff] %vm352, %v432
        %466 = vst.msk [vmem:[%s446 + $0xe2] sm:$0xff] %vm352, %v433
        %467 = vst.msk [vmem:[%s446 + $0xf2] sm:$0xff] %vm352, %v434
        %468 = vst.msk [vmem:[%s446 + $0xfa] sm:$0xff] %vm352, %v435
        %469 = vst.msk [vmem:[%s446 + $0x10a] sm:$0xff] %vm352, %v436
        %470 = vst.msk [vmem:[%s446 + $0x112] sm:$0xff] %vm352, %v437
        %471 = vst.msk [vmem:[%s446 + $0x122] sm:$0xff] %vm352, %v438
        %472 = vst.msk [vmem:[%s446 + $0x12a] sm:$0xff] %vm352, %v439
        %473 = vst.msk [vmem:[%s446 + $0x13a] sm:$0xff] %vm352, %v440
        %474 = vst.msk [vmem:[%s446 + $0x142] sm:$0xff] %vm352, %v441
        %475 = vst.msk [vmem:[%s446 + $0x152] sm:$0xff] %vm352, %v442
        %476 = vst.msk [vmem:[%s446 + $0x15a] sm:$0xff] %vm352, %v443
        %477 = vst.msk [vmem:[%s446 + $0x16a] sm:$0xff] %vm352, %v444
        %478 = vst.msk [vmem:[%s446 + $0x172] sm:$0xff] %vm352, %v445
        %v479 = vld [vmem:[%s1] sm:$0x1f]
        %v480 = vld [vmem:[%s1 + $0x8] sm:$0x1f]
        %v481 = vld [vmem:[%s1 + $0x10] sm:$0x1f]
        %v482 = vld [vmem:[%s1 + $0x18] sm:$0x1f]
        %v483 = vld [vmem:[%s1 + $0x20] sm:$0x1f]
        %v484 = vld [vmem:[#allocation2] ss:$2 sm:$0xff]
        %s485 = scalar_lea.vmem [#allocation2], 48
        %v486 = vld [vmem:[%s485] ss:$2 sm:$0xff]
        %s487 = scalar_lea.vmem [#allocation2], 96
        %v488 = vld [vmem:[%s487] ss:$2 sm:$0xff]
        %s489 = scalar_lea.vmem [#allocation2], 144
        %v490 = vld [vmem:[%s489] ss:$2 sm:$0xff]
        %s491 = scalar_lea.vmem [#allocation2], 192
        %v492 = vld [vmem:[%s491] ss:$2 sm:$0xff]
        %s493 = scalar_lea.vmem [#allocation2], 240
        %v494 = vld [vmem:[%s493] ss:$2 sm:$0xff]
        %s495 = scalar_lea.vmem [#allocation2], 288
        %v496 = vld [vmem:[%s495] ss:$2 sm:$0xff]
        %s497 = scalar_lea.vmem [#allocation2], 336
        %v498 = vld [vmem:[%s497] ss:$2 sm:$0xff]
        %v499 = vlaneseq
        %v500 = vshrl.u32 %v499, 7
        %v501 = vsub.s32 0, %v500
        %v502 = vrot.slane %v479, %v501
        %v503 = vmul.f32 %v484, %v502
        %v504 = vmul.f32 %v486, %v502
        %v505 = vmul.f32 %v488, %v502
        %v506 = vmul.f32 %v490, %v502
        %v507 = vmul.f32 %v492, %v502
        %v508 = vmul.f32 %v494, %v502
        %v509 = vmul.f32 %v496, %v502
        %v510 = vmul.f32 %v498, %v502
        %v511 = vadd.f32 %v503, 0.0
        %v512 = vadd.f32 %v504, 0.0
        %v513 = vadd.f32 %v505, 0.0
        %v514 = vadd.f32 %v506, 0.0
        %v515 = vadd.f32 %v507, 0.0
        %v516 = vadd.f32 %v508, 0.0
        %v517 = vadd.f32 %v509, 0.0
        %v518 = vadd.f32 %v510, 0.0
        %s519 = scalar_lea.vmem [#allocation2], 1
        %v520 = vld [vmem:[%s519] ss:$2 sm:$0xff]
        %s521 = scalar_lea.vmem [#allocation2], 49
        %v522 = vld [vmem:[%s521] ss:$2 sm:$0xff]
        %s523 = scalar_lea.vmem [#allocation2], 97
        %v524 = vld [vmem:[%s523] ss:$2 sm:$0xff]
        %s525 = scalar_lea.vmem [#allocation2], 145
        %v526 = vld [vmem:[%s525] ss:$2 sm:$0xff]
        %s527 = scalar_lea.vmem [#allocation2], 193
        %v528 = vld [vmem:[%s527] ss:$2 sm:$0xff]
        %s529 = scalar_lea.vmem [#allocation2], 241
        %v530 = vld [vmem:[%s529] ss:$2 sm:$0xff]
        %s531 = scalar_lea.vmem [#allocation2], 289
        %v532 = vld [vmem:[%s531] ss:$2 sm:$0xff]
        %s533 = scalar_lea.vmem [#allocation2], 337
        %v534 = vld [vmem:[%s533] ss:$2 sm:$0xff]
        %v535 = vlaneseq
        %v536 = vshrl.u32 %v535, 7
        %v537 = vsub.s32 1, %v536
        %v538 = vrot.slane %v479, %v537
        %v539 = vmul.f32 %v520, %v538
        %v540 = vmul.f32 %v522, %v538
        %v541 = vmul.f32 %v524, %v538
        %v542 = vmul.f32 %v526, %v538
        %v543 = vmul.f32 %v528, %v538
        %v544 = vmul.f32 %v530, %v538
        %v545 = vmul.f32 %v532, %v538
        %v546 = vmul.f32 %v534, %v538
        %v547 = vadd.f32 %v511, %v539
        %v548 = vadd.f32 %v512, %v540
        %v549 = vadd.f32 %v513, %v541
        %v550 = vadd.f32 %v514, %v542
        %v551 = vadd.f32 %v515, %v543
        %v552 = vadd.f32 %v516, %v544
        %v553 = vadd.f32 %v517, %v545
        %v554 = vadd.f32 %v518, %v546
        %s555 = scalar_lea.vmem [#allocation2], 2
        %v556 = vld [vmem:[%s555] ss:$2 sm:$0xff]
        %s557 = scalar_lea.vmem [#allocation2], 50
        %v558 = vld [vmem:[%s557] ss:$2 sm:$0xff]
        %s559 = scalar_lea.vmem [#allocation2], 98
        %v560 = vld [vmem:[%s559] ss:$2 sm:$0xff]
        %s561 = scalar_lea.vmem [#allocation2], 146
        %v562 = vld [vmem:[%s561] ss:$2 sm:$0xff]
        %s563 = scalar_lea.vmem [#allocation2], 194
        %v564 = vld [vmem:[%s563] ss:$2 sm:$0xff]
        %s565 = scalar_lea.vmem [#allocation2], 242
        %v566 = vld [vmem:[%s565] ss:$2 sm:$0xff]
        %s567 = scalar_lea.vmem [#allocation2], 290
        %v568 = vld [vmem:[%s567] ss:$2 sm:$0xff]
        %s569 = scalar_lea.vmem [#allocation2], 338
        %v570 = vld [vmem:[%s569] ss:$2 sm:$0xff]
        %v571 = vlaneseq
        %v572 = vshrl.u32 %v571, 7
        %v573 = vsub.s32 2, %v572
        %v574 = vrot.slane %v479, %v573
        %v575 = vmul.f32 %v556, %v574
        %v576 = vmul.f32 %v558, %v574
        %v577 = vmul.f32 %v560, %v574
        %v578 = vmul.f32 %v562, %v574
        %v579 = vmul.f32 %v564, %v574
        %v580 = vmul.f32 %v566, %v574
        %v581 = vmul.f32 %v568, %v574
        %v582 = vmul.f32 %v570, %v574
        %v583 = vadd.f32 %v547, %v575
        %v584 = vadd.f32 %v548, %v576
        %v585 = vadd.f32 %v549, %v577
        %v586 = vadd.f32 %v550, %v578
        %v587 = vadd.f32 %v551, %v579
        %v588 = vadd.f32 %v552, %v580
        %v589 = vadd.f32 %v553, %v581
        %v590 = vadd.f32 %v554, %v582
        %s591 = scalar_lea.vmem [#allocation2], 3
        %v592 = vld [vmem:[%s591] ss:$2 sm:$0xff]
        %s593 = scalar_lea.vmem [#allocation2], 51
        %v594 = vld [vmem:[%s593] ss:$2 sm:$0xff]
        %s595 = scalar_lea.vmem [#allocation2], 99
        %v596 = vld [vmem:[%s595] ss:$2 sm:$0xff]
        %s597 = scalar_lea.vmem [#allocation2], 147
        %v598 = vld [vmem:[%s597] ss:$2 sm:$0xff]
        %s599 = scalar_lea.vmem [#allocation2], 195
        %v600 = vld [vmem:[%s599] ss:$2 sm:$0xff]
        %s601 = scalar_lea.vmem [#allocation2], 243
        %v602 = vld [vmem:[%s601] ss:$2 sm:$0xff]
        %s603 = scalar_lea.vmem [#allocation2], 291
        %v604 = vld [vmem:[%s603] ss:$2 sm:$0xff]
        %s605 = scalar_lea.vmem [#allocation2], 339
        %v606 = vld [vmem:[%s605] ss:$2 sm:$0xff]
        %v607 = vlaneseq
        %v608 = vshrl.u32 %v607, 7
        %v609 = vsub.s32 3, %v608
        %v610 = vrot.slane %v479, %v609
        %v611 = vmul.f32 %v592, %v610
        %v612 = vmul.f32 %v594, %v610
        %v613 = vmul.f32 %v596, %v610
        %v614 = vmul.f32 %v598, %v610
        %v615 = vmul.f32 %v600, %v610
        %v616 = vmul.f32 %v602, %v610
        %v617 = vmul.f32 %v604, %v610
        %v618 = vmul.f32 %v606, %v610
        %v619 = vadd.f32 %v583, %v611
        %v620 = vadd.f32 %v584, %v612
        %v621 = vadd.f32 %v585, %v613
        %v622 = vadd.f32 %v586, %v614
        %v623 = vadd.f32 %v587, %v615
        %v624 = vadd.f32 %v588, %v616
        %v625 = vadd.f32 %v589, %v617
        %v626 = vadd.f32 %v590, %v618
        %s627 = scalar_lea.vmem [#allocation2], 4
        %v628 = vld [vmem:[%s627] ss:$2 sm:$0xff]
        %s629 = scalar_lea.vmem [#allocation2], 52
        %v630 = vld [vmem:[%s629] ss:$2 sm:$0xff]
        %s631 = scalar_lea.vmem [#allocation2], 100
        %v632 = vld [vmem:[%s631] ss:$2 sm:$0xff]
        %s633 = scalar_lea.vmem [#allocation2], 148
        %v634 = vld [vmem:[%s633] ss:$2 sm:$0xff]
        %s635 = scalar_lea.vmem [#allocation2], 196
        %v636 = vld [vmem:[%s635] ss:$2 sm:$0xff]
        %s637 = scalar_lea.vmem [#allocation2], 244
        %v638 = vld [vmem:[%s637] ss:$2 sm:$0xff]
        %s639 = scalar_lea.vmem [#allocation2], 292
        %v640 = vld [vmem:[%s639] ss:$2 sm:$0xff]
        %s641 = scalar_lea.vmem [#allocation2], 340
        %v642 = vld [vmem:[%s641] ss:$2 sm:$0xff]
        %v643 = vlaneseq
        %v644 = vshrl.u32 %v643, 7
        %v645 = vsub.s32 4, %v644
        %v646 = vrot.slane %v479, %v645
        %v647 = vmul.f32 %v628, %v646
        %v648 = vmul.f32 %v630, %v646
        %v649 = vmul.f32 %v632, %v646
        %v650 = vmul.f32 %v634, %v646
        %v651 = vmul.f32 %v636, %v646
        %v652 = vmul.f32 %v638, %v646
        %v653 = vmul.f32 %v640, %v646
        %v654 = vmul.f32 %v642, %v646
        %v655 = vadd.f32 %v619, %v647
        %v656 = vadd.f32 %v620, %v648
        %v657 = vadd.f32 %v621, %v649
        %v658 = vadd.f32 %v622, %v650
        %v659 = vadd.f32 %v623, %v651
        %v660 = vadd.f32 %v624, %v652
        %v661 = vadd.f32 %v625, %v653
        %v662 = vadd.f32 %v626, %v654
        %s663 = scalar_lea.vmem [#allocation2], 24
        %v664 = vld [vmem:[%s663] ss:$2 sm:$0xff]
        %s665 = scalar_lea.vmem %s663, 48 [#allocation2]
        %v666 = vld [vmem:[%s665] ss:$2 sm:$0xff]
        %s667 = scalar_lea.vmem %s663, 96 [#allocation2]
        %v668 = vld [vmem:[%s667] ss:$2 sm:$0xff]
        %s669 = scalar_lea.vmem %s663, 144 [#allocation2]
        %v670 = vld [vmem:[%s669] ss:$2 sm:$0xff]
        %s671 = scalar_lea.vmem %s663, 192 [#allocation2]
        %v672 = vld [vmem:[%s671] ss:$2 sm:$0xff]
        %s673 = scalar_lea.vmem %s663, 240 [#allocation2]
        %v674 = vld [vmem:[%s673] ss:$2 sm:$0xff]
        %s675 = scalar_lea.vmem %s663, 288 [#allocation2]
        %v676 = vld [vmem:[%s675] ss:$2 sm:$0xff]
        %s677 = scalar_lea.vmem %s663, 336 [#allocation2]
        %v678 = vld [vmem:[%s677] ss:$2 sm:$0xff]
        %v679 = vlaneseq
        %v680 = vshrl.u32 %v679, 7
        %v681 = vsub.s32 0, %v680
        %v682 = vrot.slane %v480, %v681
        %v683 = vmul.f32 %v664, %v682
        %v684 = vmul.f32 %v666, %v682
        %v685 = vmul.f32 %v668, %v682
        %v686 = vmul.f32 %v670, %v682
        %v687 = vmul.f32 %v672, %v682
        %v688 = vmul.f32 %v674, %v682
        %v689 = vmul.f32 %v676, %v682
        %v690 = vmul.f32 %v678, %v682
        %v691 = vadd.f32 %v655, %v683
        %v692 = vadd.f32 %v656, %v684
        %v693 = vadd.f32 %v657, %v685
        %v694 = vadd.f32 %v658, %v686
        %v695 = vadd.f32 %v659, %v687
        %v696 = vadd.f32 %v660, %v688
        %v697 = vadd.f32 %v661, %v689
        %v698 = vadd.f32 %v662, %v690
        %s699 = scalar_lea.vmem %s663, 1 [#allocation2]
        %v700 = vld [vmem:[%s699] ss:$2 sm:$0xff]
        %s701 = scalar_lea.vmem %s663, 49 [#allocation2]
        %v702 = vld [vmem:[%s701] ss:$2 sm:$0xff]
        %s703 = scalar_lea.vmem %s663, 97 [#allocation2]
        %v704 = vld [vmem:[%s703] ss:$2 sm:$0xff]
        %s705 = scalar_lea.vmem %s663, 145 [#allocation2]
        %v706 = vld [vmem:[%s705] ss:$2 sm:$0xff]
        %s707 = scalar_lea.vmem %s663, 193 [#allocation2]
        %v708 = vld [vmem:[%s707] ss:$2 sm:$0xff]
        %s709 = scalar_lea.vmem %s663, 241 [#allocation2]
        %v710 = vld [vmem:[%s709] ss:$2 sm:$0xff]
        %s711 = scalar_lea.vmem %s663, 289 [#allocation2]
        %v712 = vld [vmem:[%s711] ss:$2 sm:$0xff]
        %s713 = scalar_lea.vmem %s663, 337 [#allocation2]
        %v714 = vld [vmem:[%s713] ss:$2 sm:$0xff]
        %v715 = vlaneseq
        %v716 = vshrl.u32 %v715, 7
        %v717 = vsub.s32 1, %v716
        %v718 = vrot.slane %v480, %v717
        %v719 = vmul.f32 %v700, %v718
        %v720 = vmul.f32 %v702, %v718
        %v721 = vmul.f32 %v704, %v718
        %v722 = vmul.f32 %v706, %v718
        %v723 = vmul.f32 %v708, %v718
        %v724 = vmul.f32 %v710, %v718
        %v725 = vmul.f32 %v712, %v718
        %v726 = vmul.f32 %v714, %v718
        %v727 = vadd.f32 %v691, %v719
        %v728 = vadd.f32 %v692, %v720
        %v729 = vadd.f32 %v693, %v721
        %v730 = vadd.f32 %v694, %v722
        %v731 = vadd.f32 %v695, %v723
        %v732 = vadd.f32 %v696, %v724
        %v733 = vadd.f32 %v697, %v725
        %v734 = vadd.f32 %v698, %v726
        %s735 = scalar_lea.vmem %s663, 2 [#allocation2]
        %v736 = vld [vmem:[%s735] ss:$2 sm:$0xff]
        %s737 = scalar_lea.vmem %s663, 50 [#allocation2]
        %v738 = vld [vmem:[%s737] ss:$2 sm:$0xff]
        %s739 = scalar_lea.vmem %s663, 98 [#allocation2]
        %v740 = vld [vmem:[%s739] ss:$2 sm:$0xff]
        %s741 = scalar_lea.vmem %s663, 146 [#allocation2]
        %v742 = vld [vmem:[%s741] ss:$2 sm:$0xff]
        %s743 = scalar_lea.vmem %s663, 194 [#allocation2]
        %v744 = vld [vmem:[%s743] ss:$2 sm:$0xff]
        %s745 = scalar_lea.vmem %s663, 242 [#allocation2]
        %v746 = vld [vmem:[%s745] ss:$2 sm:$0xff]
        %s747 = scalar_lea.vmem %s663, 290 [#allocation2]
        %v748 = vld [vmem:[%s747] ss:$2 sm:$0xff]
        %s749 = scalar_lea.vmem %s663, 338 [#allocation2]
        %v750 = vld [vmem:[%s749] ss:$2 sm:$0xff]
        %v751 = vlaneseq
        %v752 = vshrl.u32 %v751, 7
        %v753 = vsub.s32 2, %v752
        %v754 = vrot.slane %v480, %v753
        %v755 = vmul.f32 %v736, %v754
        %v756 = vmul.f32 %v738, %v754
        %v757 = vmul.f32 %v740, %v754
        %v758 = vmul.f32 %v742, %v754
        %v759 = vmul.f32 %v744, %v754
        %v760 = vmul.f32 %v746, %v754
        %v761 = vmul.f32 %v748, %v754
        %v762 = vmul.f32 %v750, %v754
        %v763 = vadd.f32 %v727, %v755
        %v764 = vadd.f32 %v728, %v756
        %v765 = vadd.f32 %v729, %v757
        %v766 = vadd.f32 %v730, %v758
        %v767 = vadd.f32 %v731, %v759
        %v768 = vadd.f32 %v732, %v760
        %v769 = vadd.f32 %v733, %v761
        %v770 = vadd.f32 %v734, %v762
        %s771 = scalar_lea.vmem %s663, 3 [#allocation2]
        %v772 = vld [vmem:[%s771] ss:$2 sm:$0xff]
        %s773 = scalar_lea.vmem %s663, 51 [#allocation2]
        %v774 = vld [vmem:[%s773] ss:$2 sm:$0xff]
        %s775 = scalar_lea.vmem %s663, 99 [#allocation2]
        %v776 = vld [vmem:[%s775] ss:$2 sm:$0xff]
        %s777 = scalar_lea.vmem %s663, 147 [#allocation2]
        %v778 = vld [vmem:[%s777] ss:$2 sm:$0xff]
        %s779 = scalar_lea.vmem %s663, 195 [#allocation2]
        %v780 = vld [vmem:[%s779] ss:$2 sm:$0xff]
        %s781 = scalar_lea.vmem %s663, 243 [#allocation2]
        %v782 = vld [vmem:[%s781] ss:$2 sm:$0xff]
        %s783 = scalar_lea.vmem %s663, 291 [#allocation2]
        %v784 = vld [vmem:[%s783] ss:$2 sm:$0xff]
        %s785 = scalar_lea.vmem %s663, 339 [#allocation2]
        %v786 = vld [vmem:[%s785] ss:$2 sm:$0xff]
        %v787 = vlaneseq
        %v788 = vshrl.u32 %v787, 7
        %v789 = vsub.s32 3, %v788
        %v790 = vrot.slane %v480, %v789
        %v791 = vmul.f32 %v772, %v790
        %v792 = vmul.f32 %v774, %v790
        %v793 = vmul.f32 %v776, %v790
        %v794 = vmul.f32 %v778, %v790
        %v795 = vmul.f32 %v780, %v790
        %v796 = vmul.f32 %v782, %v790
        %v797 = vmul.f32 %v784, %v790
        %v798 = vmul.f32 %v786, %v790
        %v799 = vadd.f32 %v763, %v791
        %v800 = vadd.f32 %v764, %v792
        %v801 = vadd.f32 %v765, %v793
        %v802 = vadd.f32 %v766, %v794
        %v803 = vadd.f32 %v767, %v795
        %v804 = vadd.f32 %v768, %v796
        %v805 = vadd.f32 %v769, %v797
        %v806 = vadd.f32 %v770, %v798
        %s807 = scalar_lea.vmem %s663, 4 [#allocation2]
        %v808 = vld [vmem:[%s807] ss:$2 sm:$0xff]
        %s809 = scalar_lea.vmem %s663, 52 [#allocation2]
        %v810 = vld [vmem:[%s809] ss:$2 sm:$0xff]
        %s811 = scalar_lea.vmem %s663, 100 [#allocation2]
        %v812 = vld [vmem:[%s811] ss:$2 sm:$0xff]
        %s813 = scalar_lea.vmem %s663, 148 [#allocation2]
        %v814 = vld [vmem:[%s813] ss:$2 sm:$0xff]
        %s815 = scalar_lea.vmem %s663, 196 [#allocation2]
        %v816 = vld [vmem:[%s815] ss:$2 sm:$0xff]
        %s817 = scalar_lea.vmem %s663, 244 [#allocation2]
        %v818 = vld [vmem:[%s817] ss:$2 sm:$0xff]
        %s819 = scalar_lea.vmem %s663, 292 [#allocation2]
        %v820 = vld [vmem:[%s819] ss:$2 sm:$0xff]
        %s821 = scalar_lea.vmem %s663, 340 [#allocation2]
        %v822 = vld [vmem:[%s821] ss:$2 sm:$0xff]
        %v823 = vlaneseq
        %v824 = vshrl.u32 %v823, 7
        %v825 = vsub.s32 4, %v824
        %v826 = vrot.slane %v480, %v825
        %v827 = vmul.f32 %v808, %v826
        %v828 = vmul.f32 %v810, %v826
        %v829 = vmul.f32 %v812, %v826
        %v830 = vmul.f32 %v814, %v826
        %v831 = vmul.f32 %v816, %v826
        %v832 = vmul.f32 %v818, %v826
        %v833 = vmul.f32 %v820, %v826
        %v834 = vmul.f32 %v822, %v826
        %v835 = vadd.f32 %v799, %v827
        %v836 = vadd.f32 %v800, %v828
        %v837 = vadd.f32 %v801, %v829
        %v838 = vadd.f32 %v802, %v830
        %v839 = vadd.f32 %v803, %v831
        %v840 = vadd.f32 %v804, %v832
        %v841 = vadd.f32 %v805, %v833
        %v842 = vadd.f32 %v806, %v834
        %v843 = vld [vmem:[%s446] ss:$2 sm:$0xff]
        %s844 = scalar_lea.vmem %s446, 48 [#allocation2]
        %v845 = vld [vmem:[%s844] ss:$2 sm:$0xff]
        %s846 = scalar_lea.vmem %s446, 96 [#allocation2]
        %v847 = vld [vmem:[%s846] ss:$2 sm:$0xff]
        %s848 = scalar_lea.vmem %s446, 144 [#allocation2]
        %v849 = vld [vmem:[%s848] ss:$2 sm:$0xff]
        %s850 = scalar_lea.vmem %s446, 192 [#allocation2]
        %v851 = vld [vmem:[%s850] ss:$2 sm:$0xff]
        %s852 = scalar_lea.vmem %s446, 240 [#allocation2]
        %v853 = vld [vmem:[%s852] ss:$2 sm:$0xff]
        %s854 = scalar_lea.vmem %s446, 288 [#allocation2]
        %v855 = vld [vmem:[%s854] ss:$2 sm:$0xff]
        %s856 = scalar_lea.vmem %s446, 336 [#allocation2]
        %v857 = vld [vmem:[%s856] ss:$2 sm:$0xff]
        %v858 = vlaneseq
        %v859 = vshrl.u32 %v858, 7
        %v860 = vsub.s32 0, %v859
        %v861 = vrot.slane %v481, %v860
        %v862 = vmul.f32 %v843, %v861
        %v863 = vmul.f32 %v845, %v861
        %v864 = vmul.f32 %v847, %v861
        %v865 = vmul.f32 %v849, %v861
        %v866 = vmul.f32 %v851, %v861
        %v867 = vmul.f32 %v853, %v861
        %v868 = vmul.f32 %v855, %v861
        %v869 = vmul.f32 %v857, %v861
        %v870 = vadd.f32 %v835, %v862
        %v871 = vadd.f32 %v836, %v863
        %v872 = vadd.f32 %v837, %v864
        %v873 = vadd.f32 %v838, %v865
        %v874 = vadd.f32 %v839, %v866
        %v875 = vadd.f32 %v840, %v867
        %v876 = vadd.f32 %v841, %v868
        %v877 = vadd.f32 %v842, %v869
        %s878 = scalar_lea.vmem %s446, 1 [#allocation2]
        %v879 = vld [vmem:[%s878] ss:$2 sm:$0xff]
        %s880 = scalar_lea.vmem %s446, 49 [#allocation2]
        %v881 = vld [vmem:[%s880] ss:$2 sm:$0xff]
        %s882 = scalar_lea.vmem %s446, 97 [#allocation2]
        %v883 = vld [vmem:[%s882] ss:$2 sm:$0xff]
        %s884 = scalar_lea.vmem %s446, 145 [#allocation2]
        %v885 = vld [vmem:[%s884] ss:$2 sm:$0xff]
        %s886 = scalar_lea.vmem %s446, 193 [#allocation2]
        %v887 = vld [vmem:[%s886] ss:$2 sm:$0xff]
        %s888 = scalar_lea.vmem %s446, 241 [#allocation2]
        %v889 = vld [vmem:[%s888] ss:$2 sm:$0xff]
        %s890 = scalar_lea.vmem %s446, 289 [#allocation2]
        %v891 = vld [vmem:[%s890] ss:$2 sm:$0xff]
        %s892 = scalar_lea.vmem %s446, 337 [#allocation2]
        %v893 = vld [vmem:[%s892] ss:$2 sm:$0xff]
        %v894 = vlaneseq
        %v895 = vshrl.u32 %v894, 7
        %v896 = vsub.s32 1, %v895
        %v897 = vrot.slane %v481, %v896
        %v898 = vmul.f32 %v879, %v897
        %v899 = vmul.f32 %v881, %v897
        %v900 = vmul.f32 %v883, %v897
        %v901 = vmul.f32 %v885, %v897
        %v902 = vmul.f32 %v887, %v897
        %v903 = vmul.f32 %v889, %v897
        %v904 = vmul.f32 %v891, %v897
        %v905 = vmul.f32 %v893, %v897
        %v906 = vadd.f32 %v870, %v898
        %v907 = vadd.f32 %v871, %v899
        %v908 = vadd.f32 %v872, %v900
        %v909 = vadd.f32 %v873, %v901
        %v910 = vadd.f32 %v874, %v902
        %v911 = vadd.f32 %v875, %v903
        %v912 = vadd.f32 %v876, %v904
        %v913 = vadd.f32 %v877, %v905
        %s914 = scalar_lea.vmem %s446, 2 [#allocation2]
        %v915 = vld [vmem:[%s914] ss:$2 sm:$0xff]
        %s916 = scalar_lea.vmem %s446, 50 [#allocation2]
        %v917 = vld [vmem:[%s916] ss:$2 sm:$0xff]
        %s918 = scalar_lea.vmem %s446, 98 [#allocation2]
        %v919 = vld [vmem:[%s918] ss:$2 sm:$0xff]
        %s920 = scalar_lea.vmem %s446, 146 [#allocation2]
        %v921 = vld [vmem:[%s920] ss:$2 sm:$0xff]
        %s922 = scalar_lea.vmem %s446, 194 [#allocation2]
        %v923 = vld [vmem:[%s922] ss:$2 sm:$0xff]
        %s924 = scalar_lea.vmem %s446, 242 [#allocation2]
        %v925 = vld [vmem:[%s924] ss:$2 sm:$0xff]
        %s926 = scalar_lea.vmem %s446, 290 [#allocation2]
        %v927 = vld [vmem:[%s926] ss:$2 sm:$0xff]
        %s928 = scalar_lea.vmem %s446, 338 [#allocation2]
        %v929 = vld [vmem:[%s928] ss:$2 sm:$0xff]
        %v930 = vlaneseq
        %v931 = vshrl.u32 %v930, 7
        %v932 = vsub.s32 2, %v931
        %v933 = vrot.slane %v481, %v932
        %v934 = vmul.f32 %v915, %v933
        %v935 = vmul.f32 %v917, %v933
        %v936 = vmul.f32 %v919, %v933
        %v937 = vmul.f32 %v921, %v933
        %v938 = vmul.f32 %v923, %v933
        %v939 = vmul.f32 %v925, %v933
        %v940 = vmul.f32 %v927, %v933
        %v941 = vmul.f32 %v929, %v933
        %v942 = vadd.f32 %v906, %v934
        %v943 = vadd.f32 %v907, %v935
        %v944 = vadd.f32 %v908, %v936
        %v945 = vadd.f32 %v909, %v937
        %v946 = vadd.f32 %v910, %v938
        %v947 = vadd.f32 %v911, %v939
        %v948 = vadd.f32 %v912, %v940
        %v949 = vadd.f32 %v913, %v941
        %s950 = scalar_lea.vmem %s446, 3 [#allocation2]
        %v951 = vld [vmem:[%s950] ss:$2 sm:$0xff]
        %s952 = scalar_lea.vmem %s446, 51 [#allocation2]
        %v953 = vld [vmem:[%s952] ss:$2 sm:$0xff]
        %s954 = scalar_lea.vmem %s446, 99 [#allocation2]
        %v955 = vld [vmem:[%s954] ss:$2 sm:$0xff]
        %s956 = scalar_lea.vmem %s446, 147 [#allocation2]
        %v957 = vld [vmem:[%s956] ss:$2 sm:$0xff]
        %s958 = scalar_lea.vmem %s446, 195 [#allocation2]
        %v959 = vld [vmem:[%s958] ss:$2 sm:$0xff]
        %s960 = scalar_lea.vmem %s446, 243 [#allocation2]
        %v961 = vld [vmem:[%s960] ss:$2 sm:$0xff]
        %s962 = scalar_lea.vmem %s446, 291 [#allocation2]
        %v963 = vld [vmem:[%s962] ss:$2 sm:$0xff]
        %s964 = scalar_lea.vmem %s446, 339 [#allocation2]
        %v965 = vld [vmem:[%s964] ss:$2 sm:$0xff]
        %v966 = vlaneseq
        %v967 = vshrl.u32 %v966, 7
        %v968 = vsub.s32 3, %v967
        %v969 = vrot.slane %v481, %v968
        %v970 = vmul.f32 %v951, %v969
        %v971 = vmul.f32 %v953, %v969
        %v972 = vmul.f32 %v955, %v969
        %v973 = vmul.f32 %v957, %v969
        %v974 = vmul.f32 %v959, %v969
        %v975 = vmul.f32 %v961, %v969
        %v976 = vmul.f32 %v963, %v969
        %v977 = vmul.f32 %v965, %v969
        %v978 = vadd.f32 %v942, %v970
        %v979 = vadd.f32 %v943, %v971
        %v980 = vadd.f32 %v944, %v972
        %v981 = vadd.f32 %v945, %v973
        %v982 = vadd.f32 %v946, %v974
        %v983 = vadd.f32 %v947, %v975
        %v984 = vadd.f32 %v948, %v976
        %v985 = vadd.f32 %v949, %v977
        %s986 = scalar_lea.vmem %s446, 4 [#allocation2]
        %v987 = vld [vmem:[%s986] ss:$2 sm:$0xff]
        %s988 = scalar_lea.vmem %s446, 52 [#allocation2]
        %v989 = vld [vmem:[%s988] ss:$2 sm:$0xff]
        %s990 = scalar_lea.vmem %s446, 100 [#allocation2]
        %v991 = vld [vmem:[%s990] ss:$2 sm:$0xff]
        %s992 = scalar_lea.vmem %s446, 148 [#allocation2]
        %v993 = vld [vmem:[%s992] ss:$2 sm:$0xff]
        %s994 = scalar_lea.vmem %s446, 196 [#allocation2]
        %v995 = vld [vmem:[%s994] ss:$2 sm:$0xff]
        %s996 = scalar_lea.vmem %s446, 244 [#allocation2]
        %v997 = vld [vmem:[%s996] ss:$2 sm:$0xff]
        %s998 = scalar_lea.vmem %s446, 292 [#allocation2]
        %v999 = vld [vmem:[%s998] ss:$2 sm:$0xff]
        %s1000 = scalar_lea.vmem %s446, 340 [#allocation2]
        %v1001 = vld [vmem:[%s1000] ss:$2 sm:$0xff]
        %v1002 = vlaneseq
        %v1003 = vshrl.u32 %v1002, 7
        %v1004 = vsub.s32 4, %v1003
        %v1005 = vrot.slane %v481, %v1004
        %v1006 = vmul.f32 %v987, %v1005
        %v1007 = vmul.f32 %v989, %v1005
        %v1008 = vmul.f32 %v991, %v1005
        %v1009 = vmul.f32 %v993, %v1005
        %v1010 = vmul.f32 %v995, %v1005
        %v1011 = vmul.f32 %v997, %v1005
        %v1012 = vmul.f32 %v999, %v1005
        %v1013 = vmul.f32 %v1001, %v1005
        %v1014 = vadd.f32 %v978, %v1006
        %v1015 = vadd.f32 %v979, %v1007
        %v1016 = vadd.f32 %v980, %v1008
        %v1017 = vadd.f32 %v981, %v1009
        %v1018 = vadd.f32 %v982, %v1010
        %v1019 = vadd.f32 %v983, %v1011
        %v1020 = vadd.f32 %v984, %v1012
        %v1021 = vadd.f32 %v985, %v1013
        %s1022 = scalar_lea.vmem [#allocation2], 72
        %v1023 = vld [vmem:[%s1022] ss:$2 sm:$0xff]
        %s1024 = scalar_lea.vmem %s1022, 48 [#allocation2]
        %v1025 = vld [vmem:[%s1024] ss:$2 sm:$0xff]
        %s1026 = scalar_lea.vmem %s1022, 96 [#allocation2]
        %v1027 = vld [vmem:[%s1026] ss:$2 sm:$0xff]
        %s1028 = scalar_lea.vmem %s1022, 144 [#allocation2]
        %v1029 = vld [vmem:[%s1028] ss:$2 sm:$0xff]
        %s1030 = scalar_lea.vmem %s1022, 192 [#allocation2]
        %v1031 = vld [vmem:[%s1030] ss:$2 sm:$0xff]
        %s1032 = scalar_lea.vmem %s1022, 240 [#allocation2]
        %v1033 = vld [vmem:[%s1032] ss:$2 sm:$0xff]
        %s1034 = scalar_lea.vmem %s1022, 288 [#allocation2]
        %v1035 = vld [vmem:[%s1034] ss:$2 sm:$0xff]
        %s1036 = scalar_lea.vmem %s1022, 336 [#allocation2]
        %v1037 = vld [vmem:[%s1036] ss:$2 sm:$0xff]
        %v1038 = vlaneseq
        %v1039 = vshrl.u32 %v1038, 7
        %v1040 = vsub.s32 0, %v1039
        %v1041 = vrot.slane %v482, %v1040
        %v1042 = vmul.f32 %v1023, %v1041
        %v1043 = vmul.f32 %v1025, %v1041
        %v1044 = vmul.f32 %v1027, %v1041
        %v1045 = vmul.f32 %v1029, %v1041
        %v1046 = vmul.f32 %v1031, %v1041
        %v1047 = vmul.f32 %v1033, %v1041
        %v1048 = vmul.f32 %v1035, %v1041
        %v1049 = vmul.f32 %v1037, %v1041
        %v1050 = vadd.f32 %v1014, %v1042
        %v1051 = vadd.f32 %v1015, %v1043
        %v1052 = vadd.f32 %v1016, %v1044
        %v1053 = vadd.f32 %v1017, %v1045
        %v1054 = vadd.f32 %v1018, %v1046
        %v1055 = vadd.f32 %v1019, %v1047
        %v1056 = vadd.f32 %v1020, %v1048
        %v1057 = vadd.f32 %v1021, %v1049
        %s1058 = scalar_lea.vmem %s1022, 1 [#allocation2]
        %v1059 = vld [vmem:[%s1058] ss:$2 sm:$0xff]
        %s1060 = scalar_lea.vmem %s1022, 49 [#allocation2]
        %v1061 = vld [vmem:[%s1060] ss:$2 sm:$0xff]
        %s1062 = scalar_lea.vmem %s1022, 97 [#allocation2]
        %v1063 = vld [vmem:[%s1062] ss:$2 sm:$0xff]
        %s1064 = scalar_lea.vmem %s1022, 145 [#allocation2]
        %v1065 = vld [vmem:[%s1064] ss:$2 sm:$0xff]
        %s1066 = scalar_lea.vmem %s1022, 193 [#allocation2]
        %v1067 = vld [vmem:[%s1066] ss:$2 sm:$0xff]
        %s1068 = scalar_lea.vmem %s1022, 241 [#allocation2]
        %v1069 = vld [vmem:[%s1068] ss:$2 sm:$0xff]
        %s1070 = scalar_lea.vmem %s1022, 289 [#allocation2]
        %v1071 = vld [vmem:[%s1070] ss:$2 sm:$0xff]
        %s1072 = scalar_lea.vmem %s1022, 337 [#allocation2]
        %v1073 = vld [vmem:[%s1072] ss:$2 sm:$0xff]
        %v1074 = vlaneseq
        %v1075 = vshrl.u32 %v1074, 7
        %v1076 = vsub.s32 1, %v1075
        %v1077 = vrot.slane %v482, %v1076
        %v1078 = vmul.f32 %v1059, %v1077
        %v1079 = vmul.f32 %v1061, %v1077
        %v1080 = vmul.f32 %v1063, %v1077
        %v1081 = vmul.f32 %v1065, %v1077
        %v1082 = vmul.f32 %v1067, %v1077
        %v1083 = vmul.f32 %v1069, %v1077
        %v1084 = vmul.f32 %v1071, %v1077
        %v1085 = vmul.f32 %v1073, %v1077
        %v1086 = vadd.f32 %v1050, %v1078
        %v1087 = vadd.f32 %v1051, %v1079
        %v1088 = vadd.f32 %v1052, %v1080
        %v1089 = vadd.f32 %v1053, %v1081
        %v1090 = vadd.f32 %v1054, %v1082
        %v1091 = vadd.f32 %v1055, %v1083
        %v1092 = vadd.f32 %v1056, %v1084
        %v1093 = vadd.f32 %v1057, %v1085
        %s1094 = scalar_lea.vmem %s1022, 2 [#allocation2]
        %v1095 = vld [vmem:[%s1094] ss:$2 sm:$0xff]
        %s1096 = scalar_lea.vmem %s1022, 50 [#allocation2]
        %v1097 = vld [vmem:[%s1096] ss:$2 sm:$0xff]
        %s1098 = scalar_lea.vmem %s1022, 98 [#allocation2]
        %v1099 = vld [vmem:[%s1098] ss:$2 sm:$0xff]
        %s1100 = scalar_lea.vmem %s1022, 146 [#allocation2]
        %v1101 = vld [vmem:[%s1100] ss:$2 sm:$0xff]
        %s1102 = scalar_lea.vmem %s1022, 194 [#allocation2]
        %v1103 = vld [vmem:[%s1102] ss:$2 sm:$0xff]
        %s1104 = scalar_lea.vmem %s1022, 242 [#allocation2]
        %v1105 = vld [vmem:[%s1104] ss:$2 sm:$0xff]
        %s1106 = scalar_lea.vmem %s1022, 290 [#allocation2]
        %v1107 = vld [vmem:[%s1106] ss:$2 sm:$0xff]
        %s1108 = scalar_lea.vmem %s1022, 338 [#allocation2]
        %v1109 = vld [vmem:[%s1108] ss:$2 sm:$0xff]
        %v1110 = vlaneseq
        %v1111 = vshrl.u32 %v1110, 7
        %v1112 = vsub.s32 2, %v1111
        %v1113 = vrot.slane %v482, %v1112
        %v1114 = vmul.f32 %v1095, %v1113
        %v1115 = vmul.f32 %v1097, %v1113
        %v1116 = vmul.f32 %v1099, %v1113
        %v1117 = vmul.f32 %v1101, %v1113
        %v1118 = vmul.f32 %v1103, %v1113
        %v1119 = vmul.f32 %v1105, %v1113
        %v1120 = vmul.f32 %v1107, %v1113
        %v1121 = vmul.f32 %v1109, %v1113
        %v1122 = vadd.f32 %v1086, %v1114
        %v1123 = vadd.f32 %v1087, %v1115
        %v1124 = vadd.f32 %v1088, %v1116
        %v1125 = vadd.f32 %v1089, %v1117
        %v1126 = vadd.f32 %v1090, %v1118
        %v1127 = vadd.f32 %v1091, %v1119
        %v1128 = vadd.f32 %v1092, %v1120
        %v1129 = vadd.f32 %v1093, %v1121
        %s1130 = scalar_lea.vmem %s1022, 3 [#allocation2]
        %v1131 = vld [vmem:[%s1130] ss:$2 sm:$0xff]
        %s1132 = scalar_lea.vmem %s1022, 51 [#allocation2]
        %v1133 = vld [vmem:[%s1132] ss:$2 sm:$0xff]
        %s1134 = scalar_lea.vmem %s1022, 99 [#allocation2]
        %v1135 = vld [vmem:[%s1134] ss:$2 sm:$0xff]
        %s1136 = scalar_lea.vmem %s1022, 147 [#allocation2]
        %v1137 = vld [vmem:[%s1136] ss:$2 sm:$0xff]
        %s1138 = scalar_lea.vmem %s1022, 195 [#allocation2]
        %v1139 = vld [vmem:[%s1138] ss:$2 sm:$0xff]
        %s1140 = scalar_lea.vmem %s1022, 243 [#allocation2]
        %v1141 = vld [vmem:[%s1140] ss:$2 sm:$0xff]
        %s1142 = scalar_lea.vmem %s1022, 291 [#allocation2]
        %v1143 = vld [vmem:[%s1142] ss:$2 sm:$0xff]
        %s1144 = scalar_lea.vmem %s1022, 339 [#allocation2]
        %v1145 = vld [vmem:[%s1144] ss:$2 sm:$0xff]
        %v1146 = vlaneseq
        %v1147 = vshrl.u32 %v1146, 7
        %v1148 = vsub.s32 3, %v1147
        %v1149 = vrot.slane %v482, %v1148
        %v1150 = vmul.f32 %v1131, %v1149
        %v1151 = vmul.f32 %v1133, %v1149
        %v1152 = vmul.f32 %v1135, %v1149
        %v1153 = vmul.f32 %v1137, %v1149
        %v1154 = vmul.f32 %v1139, %v1149
        %v1155 = vmul.f32 %v1141, %v1149
        %v1156 = vmul.f32 %v1143, %v1149
        %v1157 = vmul.f32 %v1145, %v1149
        %v1158 = vadd.f32 %v1122, %v1150
        %v1159 = vadd.f32 %v1123, %v1151
        %v1160 = vadd.f32 %v1124, %v1152
        %v1161 = vadd.f32 %v1125, %v1153
        %v1162 = vadd.f32 %v1126, %v1154
        %v1163 = vadd.f32 %v1127, %v1155
        %v1164 = vadd.f32 %v1128, %v1156
        %v1165 = vadd.f32 %v1129, %v1157
        %s1166 = scalar_lea.vmem %s1022, 4 [#allocation2]
        %v1167 = vld [vmem:[%s1166] ss:$2 sm:$0xff]
        %s1168 = scalar_lea.vmem %s1022, 52 [#allocation2]
        %v1169 = vld [vmem:[%s1168] ss:$2 sm:$0xff]
        %s1170 = scalar_lea.vmem %s1022, 100 [#allocation2]
        %v1171 = vld [vmem:[%s1170] ss:$2 sm:$0xff]
        %s1172 = scalar_lea.vmem %s1022, 148 [#allocation2]
        %v1173 = vld [vmem:[%s1172] ss:$2 sm:$0xff]
        %s1174 = scalar_lea.vmem %s1022, 196 [#allocation2]
        %v1175 = vld [vmem:[%s1174] ss:$2 sm:$0xff]
        %s1176 = scalar_lea.vmem %s1022, 244 [#allocation2]
        %v1177 = vld [vmem:[%s1176] ss:$2 sm:$0xff]
        %s1178 = scalar_lea.vmem %s1022, 292 [#allocation2]
        %v1179 = vld [vmem:[%s1178] ss:$2 sm:$0xff]
        %s1180 = scalar_lea.vmem %s1022, 340 [#allocation2]
        %v1181 = vld [vmem:[%s1180] ss:$2 sm:$0xff]
        %v1182 = vlaneseq
        %v1183 = vshrl.u32 %v1182, 7
        %v1184 = vsub.s32 4, %v1183
        %v1185 = vrot.slane %v482, %v1184
        %v1186 = vmul.f32 %v1167, %v1185
        %v1187 = vmul.f32 %v1169, %v1185
        %v1188 = vmul.f32 %v1171, %v1185
        %v1189 = vmul.f32 %v1173, %v1185
        %v1190 = vmul.f32 %v1175, %v1185
        %v1191 = vmul.f32 %v1177, %v1185
        %v1192 = vmul.f32 %v1179, %v1185
        %v1193 = vmul.f32 %v1181, %v1185
        %v1194 = vadd.f32 %v1158, %v1186
        %v1195 = vadd.f32 %v1159, %v1187
        %v1196 = vadd.f32 %v1160, %v1188
        %v1197 = vadd.f32 %v1161, %v1189
        %v1198 = vadd.f32 %v1162, %v1190
        %v1199 = vadd.f32 %v1163, %v1191
        %v1200 = vadd.f32 %v1164, %v1192
        %v1201 = vadd.f32 %v1165, %v1193
        %s1202 = scalar_lea.vmem [#allocation2], 96
        %v1203 = vld [vmem:[%s1202] ss:$2 sm:$0xff]
        %s1204 = scalar_lea.vmem %s1202, 48 [#allocation2]
        %v1205 = vld [vmem:[%s1204] ss:$2 sm:$0xff]
        %s1206 = scalar_lea.vmem %s1202, 96 [#allocation2]
        %v1207 = vld [vmem:[%s1206] ss:$2 sm:$0xff]
        %s1208 = scalar_lea.vmem %s1202, 144 [#allocation2]
        %v1209 = vld [vmem:[%s1208] ss:$2 sm:$0xff]
        %s1210 = scalar_lea.vmem %s1202, 192 [#allocation2]
        %v1211 = vld [vmem:[%s1210] ss:$2 sm:$0xff]
        %s1212 = scalar_lea.vmem %s1202, 240 [#allocation2]
        %v1213 = vld [vmem:[%s1212] ss:$2 sm:$0xff]
        %s1214 = scalar_lea.vmem %s1202, 288 [#allocation2]
        %v1215 = vld [vmem:[%s1214] ss:$2 sm:$0xff]
        %s1216 = scalar_lea.vmem %s1202, 336 [#allocation2]
        %v1217 = vld [vmem:[%s1216] ss:$2 sm:$0xff]
        %v1218 = vlaneseq
        %v1219 = vshrl.u32 %v1218, 7
        %v1220 = vsub.s32 0, %v1219
        %v1221 = vrot.slane %v483, %v1220
        %v1222 = vmul.f32 %v1203, %v1221
        %v1223 = vmul.f32 %v1205, %v1221
        %v1224 = vmul.f32 %v1207, %v1221
        %v1225 = vmul.f32 %v1209, %v1221
        %v1226 = vmul.f32 %v1211, %v1221
        %v1227 = vmul.f32 %v1213, %v1221
        %v1228 = vmul.f32 %v1215, %v1221
        %v1229 = vmul.f32 %v1217, %v1221
        %v1230 = vadd.f32 %v1194, %v1222
        %v1231 = vadd.f32 %v1195, %v1223
        %v1232 = vadd.f32 %v1196, %v1224
        %v1233 = vadd.f32 %v1197, %v1225
        %v1234 = vadd.f32 %v1198, %v1226
        %v1235 = vadd.f32 %v1199, %v1227
        %v1236 = vadd.f32 %v1200, %v1228
        %v1237 = vadd.f32 %v1201, %v1229
        %s1238 = scalar_lea.vmem %s1202, 1 [#allocation2]
        %v1239 = vld [vmem:[%s1238] ss:$2 sm:$0xff]
        %s1240 = scalar_lea.vmem %s1202, 49 [#allocation2]
        %v1241 = vld [vmem:[%s1240] ss:$2 sm:$0xff]
        %s1242 = scalar_lea.vmem %s1202, 97 [#allocation2]
        %v1243 = vld [vmem:[%s1242] ss:$2 sm:$0xff]
        %s1244 = scalar_lea.vmem %s1202, 145 [#allocation2]
        %v1245 = vld [vmem:[%s1244] ss:$2 sm:$0xff]
        %s1246 = scalar_lea.vmem %s1202, 193 [#allocation2]
        %v1247 = vld [vmem:[%s1246] ss:$2 sm:$0xff]
        %s1248 = scalar_lea.vmem %s1202, 241 [#allocation2]
        %v1249 = vld [vmem:[%s1248] ss:$2 sm:$0xff]
        %s1250 = scalar_lea.vmem %s1202, 289 [#allocation2]
        %v1251 = vld [vmem:[%s1250] ss:$2 sm:$0xff]
        %s1252 = scalar_lea.vmem %s1202, 337 [#allocation2]
        %v1253 = vld [vmem:[%s1252] ss:$2 sm:$0xff]
        %v1254 = vlaneseq
        %v1255 = vshrl.u32 %v1254, 7
        %v1256 = vsub.s32 1, %v1255
        %v1257 = vrot.slane %v483, %v1256
        %v1258 = vmul.f32 %v1239, %v1257
        %v1259 = vmul.f32 %v1241, %v1257
        %v1260 = vmul.f32 %v1243, %v1257
        %v1261 = vmul.f32 %v1245, %v1257
        %v1262 = vmul.f32 %v1247, %v1257
        %v1263 = vmul.f32 %v1249, %v1257
        %v1264 = vmul.f32 %v1251, %v1257
        %v1265 = vmul.f32 %v1253, %v1257
        %v1266 = vadd.f32 %v1230, %v1258
        %v1267 = vadd.f32 %v1231, %v1259
        %v1268 = vadd.f32 %v1232, %v1260
        %v1269 = vadd.f32 %v1233, %v1261
        %v1270 = vadd.f32 %v1234, %v1262
        %v1271 = vadd.f32 %v1235, %v1263
        %v1272 = vadd.f32 %v1236, %v1264
        %v1273 = vadd.f32 %v1237, %v1265
        %s1274 = scalar_lea.vmem %s1202, 2 [#allocation2]
        %v1275 = vld [vmem:[%s1274] ss:$2 sm:$0xff]
        %s1276 = scalar_lea.vmem %s1202, 50 [#allocation2]
        %v1277 = vld [vmem:[%s1276] ss:$2 sm:$0xff]
        %s1278 = scalar_lea.vmem %s1202, 98 [#allocation2]
        %v1279 = vld [vmem:[%s1278] ss:$2 sm:$0xff]
        %s1280 = scalar_lea.vmem %s1202, 146 [#allocation2]
        %v1281 = vld [vmem:[%s1280] ss:$2 sm:$0xff]
        %s1282 = scalar_lea.vmem %s1202, 194 [#allocation2]
        %v1283 = vld [vmem:[%s1282] ss:$2 sm:$0xff]
        %s1284 = scalar_lea.vmem %s1202, 242 [#allocation2]
        %v1285 = vld [vmem:[%s1284] ss:$2 sm:$0xff]
        %s1286 = scalar_lea.vmem %s1202, 290 [#allocation2]
        %v1287 = vld [vmem:[%s1286] ss:$2 sm:$0xff]
        %s1288 = scalar_lea.vmem %s1202, 338 [#allocation2]
        %v1289 = vld [vmem:[%s1288] ss:$2 sm:$0xff]
        %v1290 = vlaneseq
        %v1291 = vshrl.u32 %v1290, 7
        %v1292 = vsub.s32 2, %v1291
        %v1293 = vrot.slane %v483, %v1292
        %v1294 = vmul.f32 %v1275, %v1293
        %v1295 = vmul.f32 %v1277, %v1293
        %v1296 = vmul.f32 %v1279, %v1293
        %v1297 = vmul.f32 %v1281, %v1293
        %v1298 = vmul.f32 %v1283, %v1293
        %v1299 = vmul.f32 %v1285, %v1293
        %v1300 = vmul.f32 %v1287, %v1293
        %v1301 = vmul.f32 %v1289, %v1293
        %v1302 = vadd.f32 %v1266, %v1294
        %v1303 = vadd.f32 %v1267, %v1295
        %v1304 = vadd.f32 %v1268, %v1296
        %v1305 = vadd.f32 %v1269, %v1297
        %v1306 = vadd.f32 %v1270, %v1298
        %v1307 = vadd.f32 %v1271, %v1299
        %v1308 = vadd.f32 %v1272, %v1300
        %v1309 = vadd.f32 %v1273, %v1301
        %s1310 = scalar_lea.vmem %s1202, 3 [#allocation2]
        %v1311 = vld [vmem:[%s1310] ss:$2 sm:$0xff]
        %s1312 = scalar_lea.vmem %s1202, 51 [#allocation2]
        %v1313 = vld [vmem:[%s1312] ss:$2 sm:$0xff]
        %s1314 = scalar_lea.vmem %s1202, 99 [#allocation2]
        %v1315 = vld [vmem:[%s1314] ss:$2 sm:$0xff]
        %s1316 = scalar_lea.vmem %s1202, 147 [#allocation2]
        %v1317 = vld [vmem:[%s1316] ss:$2 sm:$0xff]
        %s1318 = scalar_lea.vmem %s1202, 195 [#allocation2]
        %v1319 = vld [vmem:[%s1318] ss:$2 sm:$0xff]
        %s1320 = scalar_lea.vmem %s1202, 243 [#allocation2]
        %v1321 = vld [vmem:[%s1320] ss:$2 sm:$0xff]
        %s1322 = scalar_lea.vmem %s1202, 291 [#allocation2]
        %v1323 = vld [vmem:[%s1322] ss:$2 sm:$0xff]
        %s1324 = scalar_lea.vmem %s1202, 339 [#allocation2]
        %v1325 = vld [vmem:[%s1324] ss:$2 sm:$0xff]
        %v1326 = vlaneseq
        %v1327 = vshrl.u32 %v1326, 7
        %v1328 = vsub.s32 3, %v1327
        %v1329 = vrot.slane %v483, %v1328
        %v1330 = vmul.f32 %v1311, %v1329
        %v1331 = vmul.f32 %v1313, %v1329
        %v1332 = vmul.f32 %v1315, %v1329
        %v1333 = vmul.f32 %v1317, %v1329
        %v1334 = vmul.f32 %v1319, %v1329
        %v1335 = vmul.f32 %v1321, %v1329
        %v1336 = vmul.f32 %v1323, %v1329
        %v1337 = vmul.f32 %v1325, %v1329
        %v1338 = vadd.f32 %v1302, %v1330
        %v1339 = vadd.f32 %v1303, %v1331
        %v1340 = vadd.f32 %v1304, %v1332
        %v1341 = vadd.f32 %v1305, %v1333
        %v1342 = vadd.f32 %v1306, %v1334
        %v1343 = vadd.f32 %v1307, %v1335
        %v1344 = vadd.f32 %v1308, %v1336
        %v1345 = vadd.f32 %v1309, %v1337
        %s1346 = scalar_lea.vmem %s1202, 4 [#allocation2]
        %v1347 = vld [vmem:[%s1346] ss:$2 sm:$0xff]
        %s1348 = scalar_lea.vmem %s1202, 52 [#allocation2]
        %v1349 = vld [vmem:[%s1348] ss:$2 sm:$0xff]
        %s1350 = scalar_lea.vmem %s1202, 100 [#allocation2]
        %v1351 = vld [vmem:[%s1350] ss:$2 sm:$0xff]
        %s1352 = scalar_lea.vmem %s1202, 148 [#allocation2]
        %v1353 = vld [vmem:[%s1352] ss:$2 sm:$0xff]
        %s1354 = scalar_lea.vmem %s1202, 196 [#allocation2]
        %v1355 = vld [vmem:[%s1354] ss:$2 sm:$0xff]
        %s1356 = scalar_lea.vmem %s1202, 244 [#allocation2]
        %v1357 = vld [vmem:[%s1356] ss:$2 sm:$0xff]
        %s1358 = scalar_lea.vmem %s1202, 292 [#allocation2]
        %v1359 = vld [vmem:[%s1358] ss:$2 sm:$0xff]
        %s1360 = scalar_lea.vmem %s1202, 340 [#allocation2]
        %v1361 = vld [vmem:[%s1360] ss:$2 sm:$0xff]
        %v1362 = vlaneseq
        %v1363 = vshrl.u32 %v1362, 7
        %v1364 = vsub.s32 4, %v1363
        %v1365 = vrot.slane %v483, %v1364
        %v1366 = vmul.f32 %v1347, %v1365
        %v1367 = vmul.f32 %v1349, %v1365
        %v1368 = vmul.f32 %v1351, %v1365
        %v1369 = vmul.f32 %v1353, %v1365
        %v1370 = vmul.f32 %v1355, %v1365
        %v1371 = vmul.f32 %v1357, %v1365
        %v1372 = vmul.f32 %v1359, %v1365
        %v1373 = vmul.f32 %v1361, %v1365
        %v1374 = vadd.f32 %v1338, %v1366
        %v1375 = vadd.f32 %v1339, %v1367
        %v1376 = vadd.f32 %v1340, %v1368
        %v1377 = vadd.f32 %v1341, %v1369
        %v1378 = vadd.f32 %v1342, %v1370
        %v1379 = vadd.f32 %v1343, %v1371
        %v1380 = vadd.f32 %v1344, %v1372
        %v1381 = vadd.f32 %v1345, %v1373
        %v1382 = vld [vmem:[%s2] sm:$0x1]
        %v1384 = vlaneseq
        %v1385 = vshrl.u32 %v1384, 7
        %v1386 = vsub.s32 0, %v1385
        %v1387 = vrot.slane %v1382, %v1386
        %v1389 = vmul.f32 %v1374, %v1387
        %v1390 = vmul.f32 %v1375, %v1387
        %v1391 = vmul.f32 %v1376, %v1387
        %v1392 = vmul.f32 %v1377, %v1387
        %v1393 = vmul.f32 %v1378, %v1387
        %v1394 = vmul.f32 %v1379, %v1387
        %v1395 = vmul.f32 %v1380, %v1387
        %v1396 = vmul.f32 %v1381, %v1387
        %v1397 = vld [vmem:[%s3] sm:$0x1]
        %v1399 = vlaneseq
        %v1400 = vshrl.u32 %v1399, 7
        %v1401 = vsub.s32 0, %v1400
        %v1402 = vrot.slane %v1397, %v1401
        %v1404 = vadd.f32 %v1389, %v1402
        %v1405 = vadd.f32 %v1390, %v1402
        %v1406 = vadd.f32 %v1391, %v1402
        %v1407 = vadd.f32 %v1392, %v1402
        %v1408 = vadd.f32 %v1393, %v1402
        %v1409 = vadd.f32 %v1394, %v1402
        %v1410 = vadd.f32 %v1395, %v1402
        %v1411 = vadd.f32 %v1396, %v1402
        %v1412 = vadd.f32 %v1404, 3.0
        %v1413 = vadd.f32 %v1405, 3.0
        %v1414 = vadd.f32 %v1406, 3.0
        %v1415 = vadd.f32 %v1407, 3.0
        %v1416 = vadd.f32 %v1408, 3.0
        %v1417 = vadd.f32 %v1409, 3.0
        %v1418 = vadd.f32 %v1410, 3.0
        %v1419 = vadd.f32 %v1411, 3.0
        %v1420 = vmax.f32 %v1412, 0.0
        %v1421 = vmax.f32 %v1413, 0.0
        %v1422 = vmax.f32 %v1414, 0.0
        %v1423 = vmax.f32 %v1415, 0.0
        %v1424 = vmax.f32 %v1416, 0.0
        %v1425 = vmax.f32 %v1417, 0.0
        %v1426 = vmax.f32 %v1418, 0.0
        %v1427 = vmax.f32 %v1419, 0.0
        %v1428 = vmin.f32 %v1420, 6.0
        %v1429 = vmin.f32 %v1421, 6.0
        %v1430 = vmin.f32 %v1422, 6.0
        %v1431 = vmin.f32 %v1423, 6.0
        %v1432 = vmin.f32 %v1424, 6.0
        %v1433 = vmin.f32 %v1425, 6.0
        %v1434 = vmin.f32 %v1426, 6.0
        %v1435 = vmin.f32 %v1427, 6.0
        %v1436 = vmul.f32 %v1404, %v1428
        %v1437 = vmul.f32 %v1405, %v1429
        %v1438 = vmul.f32 %v1406, %v1430
        %v1439 = vmul.f32 %v1407, %v1431
        %v1440 = vmul.f32 %v1408, %v1432
        %v1441 = vmul.f32 %v1409, %v1433
        %v1442 = vmul.f32 %v1410, %v1434
        %v1443 = vmul.f32 %v1411, %v1435
        %v1444 = vmul.f32 %v1436, 0.16666667
        %v1445 = vmul.f32 %v1437, 0.16666667
        %v1446 = vmul.f32 %v1438, 0.16666667
        %v1447 = vmul.f32 %v1439, 0.16666667
        %v1448 = vmul.f32 %v1440, 0.16666667
        %v1449 = vmul.f32 %v1441, 0.16666667
        %v1450 = vmul.f32 %v1442, 0.16666667
        %v1451 = vmul.f32 %v1443, 0.16666667
        %v1452 = vpack.c.bf16 %v1445, %v1444
        %v1453 = vpack.c.bf16 %v1447, %v1446
        %v1454 = vpack.c.bf16 %v1449, %v1448
        %v1455 = vpack.c.bf16 %v1451, %v1450
        %v1456 = vld [vmem:[%s4] sm:$0xff]
        %v1457 = vld [vmem:[%s4 + $0x8] sm:$0xff]
        %v1458 = vld [vmem:[%s4 + $0x10] sm:$0xff]
        %v1459 = vld [vmem:[%s4 + $0x18] sm:$0xff]
        %v1460 = vld [vmem:[%s4 + $0x20] sm:$0xff]
        %v1461 = vld [vmem:[%s4 + $0x28] sm:$0xff]
        %v1462 = vld [vmem:[%s4 + $0x30] sm:$0xff]
        %v1463 = vld [vmem:[%s4 + $0x38] sm:$0xff]
        %v1464 = vpack.c.bf16 %v1457, %v1456
        %v1465 = vpack.c.bf16 %v1459, %v1458
        %v1466 = vpack.c.bf16 %v1461, %v1460
        %v1467 = vpack.c.bf16 %v1463, %v1462
        %v1469 = vsel %vm352, %v1452, 0
        %v1472 = vsel %vm352, %v1453, 0
        %v1475 = vsel %vm352, %v1454, 0
        %v1478 = vsel %vm352, %v1455, 0
        %1480 = vmatprep.subr.bf16.mxu0 0
        %1481 = vmatpush1.bf16.msra.mxu0 %v1464
        %1482 = vmatprep.subr.bf16.mxu0 0
        %1483 = vmatpush1.bf16.msra.mxu0 %v1465
        %1484 = vmatprep.subr.bf16.mxu0 0
        %1485 = vmatpush1.bf16.msra.mxu0 %v1466
        %1486 = vmatprep.subr.bf16.mxu0 0
        %1487 = vmatpush1.bf16.msra.mxu0 %v1467
        %1488 = vmatprep.subr.bf16.mxu0 0
        %1489 = vmatpush1.bf16.msra.mxu0 0
        %1490 = vmatprep.subr.bf16.mxu0 0
        %1491 = vmatpush1.bf16.msra.mxu0 0
        %1492 = vmatprep.subr.bf16.mxu0 0
        %1493 = vmatpush1.bf16.msra.mxu0 0
        %1494 = vmatprep.subr.bf16.mxu0 0
        %1495 = vmatpush1.bf16.msra.mxu0 0
        %1496 = vmatprep.subr.bf16.mxu0 0
        %1497 = vmatpush1.bf16.msra.mxu0 0
        %1498 = vmatprep.subr.bf16.mxu0 0
        %1499 = vmatpush1.bf16.msra.mxu0 0
        %1500 = vmatprep.subr.bf16.mxu0 0
        %1501 = vmatpush1.bf16.msra.mxu0 0
        %1502 = vmatprep.subr.bf16.mxu0 0
        %1503 = vmatpush1.bf16.msra.mxu0 0
        %1504 = vmatprep.subr.bf16.mxu0 0
        %1505 = vmatpush1.bf16.msra.mxu0 0
        %1506 = vmatprep.subr.bf16.mxu0 0
        %1507 = vmatpush1.bf16.msra.mxu0 0
        %1508 = vmatprep.subr.bf16.mxu0 0
        %1509 = vmatpush1.bf16.msra.mxu0 0
        %1510 = vmatprep.subr.bf16.mxu0 0
        %1511 = vmatpush1.bf16.msra.mxu0 0
        %1512 = vmatprep.mubr.bf16.mxu0 0
        %1513 = vmatmul.mubr.bf16.gmra.mrb[0].mxu0 %v1469
        %v1514 = vpop.f32.mrb[0].mxu0
        %v1515 = vadd.f32 0.0, %v1514
        %v1516 = vpop.f32.mrb[0].mxu0
        %v1517 = vpop.f32.mrb[0].mxu0
        %v1518 = vadd.f32 0.0, %v1517
        %v1519 = vpop.f32.mrb[0].mxu0
        %1520 = vmatprep.mubr.bf16.mxu0 0
        %1521 = vmatmul.mubr.bf16.gmra.mrb[0].mxu0 %v1472
        %v1522 = vpop.f32.mrb[0].mxu0
        %v1523 = vadd.f32 0.0, %v1522
        %v1524 = vpop.f32.mrb[0].mxu0
        %v1525 = vpop.f32.mrb[0].mxu0
        %v1526 = vadd.f32 0.0, %v1525
        %v1527 = vpop.f32.mrb[0].mxu0
        %1528 = vmatprep.mubr.bf16.mxu0 0
        %1529 = vmatmul.mubr.bf16.gmra.mrb[0].mxu0 %v1475
        %v1530 = vpop.f32.mrb[0].mxu0
        %v1531 = vadd.f32 0.0, %v1530
        %v1532 = vpop.f32.mrb[0].mxu0
        %v1533 = vpop.f32.mrb[0].mxu0
        %v1534 = vadd.f32 0.0, %v1533
        %v1535 = vpop.f32.mrb[0].mxu0
        %1536 = vmatprep.mubr.bf16.mxu0 0
        %1537 = vmatmul.mubr.bf16.gmra.mrb[0].mxu0 %v1478
        %v1538 = vpop.f32.mrb[0].mxu0
        %v1539 = vadd.f32 0.0, %v1538
        %v1540 = vpop.f32.mrb[0].mxu0
        %v1541 = vpop.f32.mrb[0].mxu0
        %v1542 = vadd.f32 0.0, %v1541
        %v1543 = vpop.f32.mrb[0].mxu0
        %1544 = vdwg.mxu0
        %v1545 = vld [vmem:[%s5] sm:$0x1]
        %v1547 = vlaneseq
        %v1548 = vshrl.u32 %v1547, 7
        %v1549 = vsub.s32 0, %v1548
        %v1550 = vrot.slane %v1545, %v1549
        %v1552 = vmul.f32 %v1515, %v1550
        %v1553 = vmul.f32 %v1518, %v1550
        %v1554 = vmul.f32 %v1523, %v1550
        %v1555 = vmul.f32 %v1526, %v1550
        %v1556 = vmul.f32 %v1531, %v1550
        %v1557 = vmul.f32 %v1534, %v1550
        %v1558 = vmul.f32 %v1539, %v1550
        %v1559 = vmul.f32 %v1542, %v1550
        %v1560 = vld [vmem:[%s6] sm:$0x1]
        %v1562 = vlaneseq
        %v1563 = vshrl.u32 %v1562, 7
        %v1564 = vsub.s32 0, %v1563
        %v1565 = vrot.slane %v1560, %v1564
        %v1567 = vadd.f32 %v1552, %v1565
        %v1568 = vadd.f32 %v1553, %v1565
        %v1569 = vadd.f32 %v1554, %v1565
        %v1570 = vadd.f32 %v1555, %v1565
        %v1571 = vadd.f32 %v1556, %v1565
        %v1572 = vadd.f32 %v1557, %v1565
        %v1573 = vadd.f32 %v1558, %v1565
        %v1574 = vadd.f32 %v1559, %v1565
        %v1575 = vadd.f32 %v1567, 3.0
        %v1576 = vadd.f32 %v1568, 3.0
        %v1577 = vadd.f32 %v1569, 3.0
        %v1578 = vadd.f32 %v1570, 3.0
        %v1579 = vadd.f32 %v1571, 3.0
        %v1580 = vadd.f32 %v1572, 3.0
        %v1581 = vadd.f32 %v1573, 3.0
        %v1582 = vadd.f32 %v1574, 3.0
        %v1583 = vmax.f32 %v1575, 0.0
        %v1584 = vmax.f32 %v1576, 0.0
        %v1585 = vmax.f32 %v1577, 0.0
        %v1586 = vmax.f32 %v1578, 0.0
        %v1587 = vmax.f32 %v1579, 0.0
        %v1588 = vmax.f32 %v1580, 0.0
        %v1589 = vmax.f32 %v1581, 0.0
        %v1590 = vmax.f32 %v1582, 0.0
        %v1591 = vmin.f32 %v1583, 6.0
        %v1592 = vmin.f32 %v1584, 6.0
        %v1593 = vmin.f32 %v1585, 6.0
        %v1594 = vmin.f32 %v1586, 6.0
        %v1595 = vmin.f32 %v1587, 6.0
        %v1596 = vmin.f32 %v1588, 6.0
        %v1597 = vmin.f32 %v1589, 6.0
        %v1598 = vmin.f32 %v1590, 6.0
        %v1599 = vmul.f32 %v1567, %v1591
        %v1600 = vmul.f32 %v1568, %v1592
        %v1601 = vmul.f32 %v1569, %v1593
        %v1602 = vmul.f32 %v1570, %v1594
        %v1603 = vmul.f32 %v1571, %v1595
        %v1604 = vmul.f32 %v1572, %v1596
        %v1605 = vmul.f32 %v1573, %v1597
        %v1606 = vmul.f32 %v1574, %v1598
        %v1607 = vmul.f32 %v1599, 0.16666667
        %v1608 = vmul.f32 %v1600, 0.16666667
        %v1609 = vmul.f32 %v1601, 0.16666667
        %v1610 = vmul.f32 %v1602, 0.16666667
        %v1611 = vmul.f32 %v1603, 0.16666667
        %v1612 = vmul.f32 %v1604, 0.16666667
        %v1613 = vmul.f32 %v1605, 0.16666667
        %v1614 = vmul.f32 %v1606, 0.16666667
        %v1615 = vadd.f32 %v1607, %v1608
        %v1616 = vadd.f32 %v1615, %v1609
        %v1617 = vadd.f32 %v1616, %v1610
        %v1618 = vadd.f32 %v1617, %v1611
        %v1619 = vadd.f32 %v1618, %v1612
        %v1620 = vadd.f32 %v1619, %v1613
        %v1621 = vadd.f32 %v1620, %v1614
        %v1622 = vrot.slane %v1621, 4
        %v1623 = vadd.f32 %v1621, %v1622
        %v1624 = vrot.slane %v1623, 2
        %v1625 = vadd.f32 %v1623, %v1624
        %v1626 = vrot.slane %v1625, 1
        %v1627 = vadd.f32 %v1625, %v1626
        %v1628 = vmul.f32 %v1627, 0.015625
        %v1629 = vld [vmem:[%s7] sm:$0xff]
        %v1630 = vld [vmem:[%s7 + $0x8] sm:$0xff]
        %v1631 = vld [vmem:[%s7 + $0x10] sm:$0xff]
        %v1632 = vld [vmem:[%s7 + $0x18] sm:$0xff]
        %v1633 = vld [vmem:[%s7 + $0x20] sm:$0xff]
        %v1634 = vld [vmem:[%s7 + $0x28] sm:$0xff]
        %v1635 = vld [vmem:[%s7 + $0x30] sm:$0xff]
        %v1636 = vld [vmem:[%s7 + $0x38] sm:$0xff]
        %v1637 = vld [vmem:[%s7 + $0x40] sm:$0xff]
        %v1638 = vld [vmem:[%s7 + $0x48] sm:$0xff]
        %v1639 = vld [vmem:[%s7 + $0x50] sm:$0xff]
        %v1640 = vld [vmem:[%s7 + $0x58] sm:$0xff]
        %v1641 = vld [vmem:[%s7 + $0x60] sm:$0xff]
        %v1642 = vld [vmem:[%s7 + $0x68] sm:$0xff]
        %v1643 = vld [vmem:[%s7 + $0x70] sm:$0xff]
        %v1644 = vld [vmem:[%s7 + $0x78] sm:$0xff]
        %1645 = vmatprep.subr.mxu0 0.0
        %1646 = vmatpush1.msra.mxu0 %v1629
        %1647 = vmatprep.subr.mxu0 0.0
        %1648 = vmatpush1.msra.mxu0 %v1630
        %1649 = vmatprep.subr.mxu0 0.0
        %1650 = vmatpush1.msra.mxu0 %v1631
        %1651 = vmatprep.subr.mxu0 0.0
        %1652 = vmatpush1.msra.mxu0 %v1632
        %1653 = vmatprep.subr.mxu0 0.0
        %1654 = vmatpush1.msra.mxu0 %v1633
        %1655 = vmatprep.subr.mxu0 0.0
        %1656 = vmatpush1.msra.mxu0 %v1634
        %1657 = vmatprep.subr.mxu0 0.0
        %1658 = vmatpush1.msra.mxu0 %v1635
        %1659 = vmatprep.subr.mxu0 0.0
        %1660 = vmatpush1.msra.mxu0 %v1636
        %1661 = vmatprep.subr.mxu0 0.0
        %1662 = vmatpush1.msra.mxu0 %v1637
        %1663 = vmatprep.subr.mxu0 0.0
        %1664 = vmatpush1.msra.mxu0 %v1638
        %1665 = vmatprep.subr.mxu0 0.0
        %1666 = vmatpush1.msra.mxu0 %v1639
        %1667 = vmatprep.subr.mxu0 0.0
        %1668 = vmatpush1.msra.mxu0 %v1640
        %1669 = vmatprep.subr.mxu0 0.0
        %1670 = vmatpush1.msra.mxu0 %v1641
        %1671 = vmatprep.subr.mxu0 0.0
        %1672 = vmatpush1.msra.mxu0 %v1642
        %1673 = vmatprep.subr.mxu0 0.0
        %1674 = vmatpush1.msra.mxu0 %v1643
        %1675 = vmatprep.subr.mxu0 0.0
        %1676 = vmatpush1.msra.mxu0 %v1644
        %1677 = vmatprep.subr.mxu0 0.0
        %1678 = vmatpush1.msra.mxu0 0.0
        %1679 = vmatprep.subr.mxu0 0.0
        %1680 = vmatpush1.msra.mxu0 0.0
        %1681 = vmatprep.subr.mxu0 0.0
        %1682 = vmatpush1.msra.mxu0 0.0
        %1683 = vmatprep.subr.mxu0 0.0
        %1684 = vmatpush1.msra.mxu0 0.0
        %1685 = vmatprep.subr.mxu0 0.0
        %1686 = vmatpush1.msra.mxu0 0.0
        %1687 = vmatprep.subr.mxu0 0.0
        %1688 = vmatpush1.msra.mxu0 0.0
        %1689 = vmatprep.subr.mxu0 0.0
        %1690 = vmatpush1.msra.mxu0 0.0
        %1691 = vmatprep.subr.mxu0 0.0
        %1692 = vmatpush1.msra.mxu0 0.0
        %1693 = vmatprep.subr.mxu0 0.0
        %1694 = vmatpush1.msra.mxu0 0.0
        %1695 = vmatprep.subr.mxu0 0.0
        %1696 = vmatpush1.msra.mxu0 0.0
        %1697 = vmatprep.subr.mxu0 0.0
        %1698 = vmatpush1.msra.mxu0 0.0
        %1699 = vmatprep.subr.mxu0 0.0
        %1700 = vmatpush1.msra.mxu0 0.0
        %1701 = vmatprep.subr.mxu0 0.0
        %1702 = vmatpush1.msra.mxu0 0.0
        %1703 = vmatprep.subr.mxu0 0.0
        %1704 = vmatpush1.msra.mxu0 0.0
        %1705 = vmatprep.subr.mxu0 0.0
        %1706 = vmatpush1.msra.mxu0 0.0
        %1707 = vmatprep.subr.mxu0 0.0
        %1708 = vmatpush1.msra.mxu0 0.0
        %1709 = vmatprep.mubr.f32.mxu0 0.0
        %1710 = vmatmul.mubr.f32.gmra.mrb[0].mxu0 %v1628
        %v1711 = vpop.f32.mrb[0].mxu0
        %v1712 = vadd.f32 0.0, %v1711
        %v1713 = vpop.f32.mrb[0].mxu0
        %1714 = vdwg.mxu0
        %v1715 = vmax.f32 %v1712, 0.0
        %v1716 = vld [vmem:[%s8] sm:$0xff]
        %vm1717 = vcmask 64512
        %v1719 = vsel %vm1717, %v1715, 0
        %1721 = vmatprep.subr.mxu0 0.0
        %1722 = vmatpush1.msra.mxu0 %v1716
        %1723 = vmatprep.subr.mxu0 0.0
        %1724 = vmatpush1.msra.mxu0 0.0
        %1725 = vmatprep.subr.mxu0 0.0
        %1726 = vmatpush1.msra.mxu0 0.0
        %1727 = vmatprep.subr.mxu0 0.0
        %1728 = vmatpush1.msra.mxu0 0.0
        %1729 = vmatprep.subr.mxu0 0.0
        %1730 = vmatpush1.msra.mxu0 0.0
        %1731 = vmatprep.subr.mxu0 0.0
        %1732 = vmatpush1.msra.mxu0 0.0
        %1733 = vmatprep.subr.mxu0 0.0
        %1734 = vmatpush1.msra.mxu0 0.0
        %1735 = vmatprep.subr.mxu0 0.0
        %1736 = vmatpush1.msra.mxu0 0.0
        %1737 = vmatprep.subr.mxu0 0.0
        %1738 = vmatpush1.msra.mxu0 0.0
        %1739 = vmatprep.subr.mxu0 0.0
        %1740 = vmatpush1.msra.mxu0 0.0
        %1741 = vmatprep.subr.mxu0 0.0
        %1742 = vmatpush1.msra.mxu0 0.0
        %1743 = vmatprep.subr.mxu0 0.0
        %1744 = vmatpush1.msra.mxu0 0.0
        %1745 = vmatprep.subr.mxu0 0.0
        %1746 = vmatpush1.msra.mxu0 0.0
        %1747 = vmatprep.subr.mxu0 0.0
        %1748 = vmatpush1.msra.mxu0 0.0
        %1749 = vmatprep.subr.mxu0 0.0
        %1750 = vmatpush1.msra.mxu0 0.0
        %1751 = vmatprep.subr.mxu0 0.0
        %1752 = vmatpush1.msra.mxu0 0.0
        %1753 = vmatprep.subr.mxu0 0.0
        %1754 = vmatpush1.msra.mxu0 0.0
        %1755 = vmatprep.subr.mxu0 0.0
        %1756 = vmatpush1.msra.mxu0 0.0
        %1757 = vmatprep.subr.mxu0 0.0
        %1758 = vmatpush1.msra.mxu0 0.0
        %1759 = vmatprep.subr.mxu0 0.0
        %1760 = vmatpush1.msra.mxu0 0.0
        %1761 = vmatprep.subr.mxu0 0.0
        %1762 = vmatpush1.msra.mxu0 0.0
        %1763 = vmatprep.subr.mxu0 0.0
        %1764 = vmatpush1.msra.mxu0 0.0
        %1765 = vmatprep.subr.mxu0 0.0
        %1766 = vmatpush1.msra.mxu0 0.0
        %1767 = vmatprep.subr.mxu0 0.0
        %1768 = vmatpush1.msra.mxu0 0.0
        %1769 = vmatprep.subr.mxu0 0.0
        %1770 = vmatpush1.msra.mxu0 0.0
        %1771 = vmatprep.subr.mxu0 0.0
        %1772 = vmatpush1.msra.mxu0 0.0
        %1773 = vmatprep.subr.mxu0 0.0
        %1774 = vmatpush1.msra.mxu0 0.0
        %1775 = vmatprep.subr.mxu0 0.0
        %1776 = vmatpush1.msra.mxu0 0.0
        %1777 = vmatprep.subr.mxu0 0.0
        %1778 = vmatpush1.msra.mxu0 0.0
        %1779 = vmatprep.subr.mxu0 0.0
        %1780 = vmatpush1.msra.mxu0 0.0
        %1781 = vmatprep.subr.mxu0 0.0
        %1782 = vmatpush1.msra.mxu0 0.0
        %1783 = vmatprep.subr.mxu0 0.0
        %1784 = vmatpush1.msra.mxu0 0.0
        %1785 = vmatprep.mubr.f32.mxu0 0.0
        %1786 = vmatmul.mubr.f32.gmra.mrb[0].mxu0 %v1719
        %v1787 = vpop.f32.mrb[0].mxu0
        %v1788 = vadd.f32 0.0, %v1787
        %v1789 = vpop.f32.mrb[0].mxu0
        %1790 = vdwg.mxu0
        %v1791 = vadd.f32 %v1788, 3.0
        %v1792 = vmax.f32 %v1791, 0.0
        %v1793 = vmin.f32 %v1792, 6.0
        %v1794 = vmul.f32 %v1788, %v1793
        %v1795 = vmul.f32 %v1794, 0.16666667
        %v1796 = vmul.f32 %v1788, %v1795
        %v1797 = vlaneseq
        %v1798 = vshrl.u32 %v1797, 7
        %v1799 = vsub.s32 0, %v1798
        %v1800 = vrot.slane %v1796, %v1799
        %v1801 = vmul.f32 %v1607, %v1800
        %v1802 = vmul.f32 %v1608, %v1800
        %v1803 = vmul.f32 %v1609, %v1800
        %v1804 = vmul.f32 %v1610, %v1800
        %v1805 = vmul.f32 %v1611, %v1800
        %v1806 = vmul.f32 %v1612, %v1800
        %v1807 = vmul.f32 %v1613, %v1800
        %v1808 = vmul.f32 %v1614, %v1800
        %1809 = vst [vmem:[%s350] sm:$0xff] %v1801
        %1810 = vst [vmem:[%s350 + $0x8] sm:$0xff] %v1802
        %1811 = vst [vmem:[%s350 + $0x10] sm:$0xff] %v1803
        %1812 = vst [vmem:[%s350 + $0x18] sm:$0xff] %v1804
        %1813 = vst [vmem:[%s350 + $0x20] sm:$0xff] %v1805
        %1814 = vst [vmem:[%s350 + $0x28] sm:$0xff] %v1806
        %1815 = vst [vmem:[%s350 + $0x30] sm:$0xff] %v1807
        %1816 = vst [vmem:[%s350 + $0x38] sm:$0xff] %v1808
        %s1817 = sand.u32 %s228, 1
        %s1818 = scalar_lea.sflag [#allocation5], %s1817
        %s1819 = sand.u32 %s228, 1
        %s1820 = smul.addr %s1819, 64
        %s1821 = scalar_lea.vmem [#allocation6], %s1820
        // Predicated region
        $region61: #{tpu_custom_call.1} parent=55 // pred_check
          %p1822 = pneg %p238
        $region62: #{tpu_custom_call.1} parent=55 // pred_check_branch
          %1824 = sbr.rel (%p1822) target = $region64
        $region63: #{tpu_custom_call.1} parent=55 // pred_region
          %s1826 = ssub.s32 1024, 1024
          %1827 = vsyncadd %s1818, %s1826
          %s1828 = smul.addr %s26, 8
          %s1829 = smul.addr %s1828, 128
          %s1830 = scalar_lea.hbm %s9, %s1829
          %s1831 = sshll.u32 %s1821, 4
          %s1832 = int_to_ptr.vmem [resolvable:$true] %s1831
          %1837 = dma.vmem_to_hbm [thread:$0]  %s1832, 1024, %s1830, %s1818, 128, 128, 8
        $region64: #{tpu_custom_call.1} parent=55 // pred_fallthru
          _
      $region56: #{tpu_custom_call.1} parent=5 // pred_fallthru
        _
      %p1838 = scmp.le.s32.totalorder 2, %s21
      // Predicated region
      $region65: #{tpu_custom_call.1} parent=5 // pred_check
        %p1839 = pneg %p1838
      $region66: #{tpu_custom_call.1} parent=5 // pred_check_branch
        %1841 = sbr.rel (%p1839) target = $region68
      $region67: #{tpu_custom_call.1} parent=5 // pred_region
        %s1842 = ssub.s32 %s21, 2
        // Predicated region
        $region69: #{tpu_custom_call.1} parent=67 // pred_check
          %p1843 = pneg %p244
        $region70: #{tpu_custom_call.1} parent=67 // pred_check_branch
          %1845 = sbr.rel (%p1843) target = $region72
        $region71: #{tpu_custom_call.1} parent=67 // pred_region
          %s1846 = sand.u32 %s229, 1
          %s1847 = scalar_lea.sflag [#allocation5], %s1846
          %s1848 = sand.u32 %s229, 1
          %s1849 = smul.addr %s1848, 64
          %s1850 = scalar_lea.vmem [#allocation6], %s1849
          %1851 = dma.done %s1847, 1024
        $region72: #{tpu_custom_call.1} parent=67 // pred_fallthru
          _
      $region68: #{tpu_custom_call.1} parent=5 // pred_fallthru
        _
    $region6: #{tpu_custom_call.1} parent=1 // loop_footer
      %s25 = sadd.s32 1, %s21
    $region7: #{tpu_custom_call.1} parent=1 // loop_footer_branch
      %20 = sbr.rel target = $region3
    $region8: #{tpu_custom_call.1} parent=1 // loop_exit
      _
    %1852 = vsyncpa [#allocation4], 1
    %s1853 = scalar_lea.sflag [#allocation4], 1
    %1854 = vsyncpa %s1853, 1
    %1855 = vsyncpa [#allocation5], 1
    %s1856 = scalar_lea.sflag [#allocation5], 1
    %1857 = vsyncpa %s1856, 1

</llo_original>
